<compile_context>
chip_gen: v5e
topology: v5e:2x2
jax: 0.10.0
libtpu: 0.0.40
codegen_flags: <defaults>
</compile_context>

<pallas_src>
import functools

import jax
import jax.numpy as jnp
import numpy as np
from jax.experimental import pallas as pl
from jax.experimental.pallas import tpu as pltpu


# ---------------------------------------------------------------------------
# Static per-layer geometry derived from the module config.
# Each entry: (H_in, W_in, Cin, Cout, is_last)   (output spatial = 2*H_in x 2*W_in)
# ---------------------------------------------------------------------------
def _layer_meta(cfg):
    metas = []
    H = cfg['sz']
    cin = cfg['nn0']
    nn = cfg['nn0']
    for _ in range(cfg['depth'] - 1):
        cout = nn // cfg['nodemul']
        metas.append((H, H, cin, cout, False))
        nn = cout
        cin = cout
        H *= 2
    metas.append((H, H, cin, cfg['channels'], True))
    return tuple(metas)


# ---------------------------------------------------------------------------
# Fused generator kernel.  One grid step == one batch element.
#
# refs layout (inputs, outputs, scratch):
#   x_ref      : (1, 1, input_dim)            bf16
#   lin_w_ref  : (input_dim, sz*sz*nn0)       bf16  (columns permuted to NHWC order)
#   lin_b_ref  : (1, sz*sz*nn0)               f32
#   per layer  : wb (3*(W+2)*Cin, 4*W*Cout)   bf16  (dy-banded sub-pixel weight)
#                bct (1, 4*W*Cout)            f32
#                [w1 (4*W*Cout, 4*W*Cout)     bf16  (block-diag per-pixel 1x1 weight)
#                 b1 (1, 4*W*Cout)            f32 ]  (non-last layers only)
#   out_ref    : (imgsz, imgsz*channels)      f32   (row = image row, lanes = (x, c))
#   pads[l]    : VMEM (H_l+2, (W_l+2)*Cin_l)  f32   (padded activation scratch per layer)
# ---------------------------------------------------------------------------
def _fused_generator_kernel(*refs, layers, sz, nn0):
    n_layers = len(layers)
    it = iter(refs)
    x_ref = next(it)
    lw_ref = next(it)
    lb_ref = next(it)
    layer_refs = []
    for (_h, _w, _ci, _co, last) in layers:
        if last:
            layer_refs.append((next(it), next(it), None, None))
        else:
            layer_refs.append((next(it), next(it), next(it), next(it)))
    out_ref = next(it)
    pads = [next(it) for _ in range(n_layers)]

    # ---- Linear + ReLU -> rows of the layer-0 padded scratch (lane-dense (x, c) rows).
    lin = jnp.dot(x_ref[0], lw_ref[...], preferred_element_type=jnp.float32)
    lin = jnp.maximum(lin + lb_ref[...], 0.0)              # (1, sz*sz*nn0) f32, NHWC order
    p0 = pads[0]
    p0[...] = jnp.zeros_like(p0)                            # zero border (and interior)
    row_w = sz * nn0
    for y in range(sz):                                     # sz is tiny (2): static unroll
        p0[1 + y:2 + y, nn0:nn0 + row_w] = lin[0:1, y * row_w:(y + 1) * row_w]

    # ---- depth x [sub-pixel ConvT (+bias) then (ReLU + 1x1 + bias + ReLU) | tanh]
    for li, (H, W, Cin, Cout, last) in enumerate(layers):
        wb_ref, bct_ref, w1_ref, b1_ref = layer_refs[li]
        pref = pads[li]
        Kl = (W + 2) * Cin
        acc = bct_ref[...]                                  # (1, 4*W*Cout) f32 (bias)
        for dy in range(3):                                 # 3 dy-band matmuls on the MXU
            lhs = pref[dy:dy + H, :].astype(jnp.bfloat16)   # (H, (W+2)*Cin)
            acc = acc + jnp.dot(lhs, wb_ref[dy * Kl:(dy + 1) * Kl, :],
                                preferred_element_type=jnp.float32)
        # acc: (H, 4*W*Cout), columns ordered (py, xo, px, cout)
        half = 2 * W * Cout
        if last:
            o = jnp.tanh(acc)                               # fused bias + tanh epilogue
            for py in range(2):                             # y-phase interleave via stores
                op = o[:, py * half:(py + 1) * half]        # (H, 2*W*channels) = (xn, c)
                for yo in range(H):
                    out_ref[2 * yo + py:2 * yo + py + 1, :] = op[yo:yo + 1, :]
        else:
            h = jnp.maximum(acc, 0.0).astype(jnp.bfloat16)  # fused ReLU
            h = jnp.dot(h, w1_ref[...],                     # fused 1x1 conv (block-diag)
                        preferred_element_type=jnp.float32) + b1_ref[...]
            h = jnp.maximum(h, 0.0)                         # fused ReLU feeding next layer
            nxt = pads[li + 1]
            nxt[...] = jnp.zeros_like(nxt)                  # next layer's zero padding
            for py in range(2):
                hp = h[:, py * half:(py + 1) * half]        # (H, 2*W*Cout), cols (xn, c)
                for yo in range(H):                         # H <= 4 here: static unroll
                    nxt[1 + 2 * yo + py:2 + 2 * yo + py, Cout:Cout + half] = hp[yo:yo + 1, :]


# ---------------------------------------------------------------------------
# Weight preparation (hoisted out of the forward path, done once at init).
# ---------------------------------------------------------------------------
def _banded_convt_weight(w_iohw, W):
    """PyTorch ConvTranspose2d weight (Cin, Cout, 5, 5), stride=2, pad=2, out_pad=1 ->
    dy-banded sub-pixel matmul weight of shape (3*(W+2)*Cin, 4*W*Cout).

    Row index    : dy*(W+2)*Cin + xin*Cin + cin   (xin = padded input column group)
    Column index : py*(2*W*Cout) + xo*(2*Cout) + px*Cout + cout
    Output pixel (2*yo+py, 2*xo+px, cout) = sum over dy of
        padded_in[yo+dy, xin, cin] * w[cin, cout, 4+py-2*dy, 4+px-2*(xin-xo)]
    for xin in {xo, xo+1, xo+2} and kernel indices inside [0, 5).
    """
    w = np.asarray(w_iohw, np.float32)
    cin, cout, K, _ = w.shape
    Wp = W + 2
    ncols = 4 * W * cout
    wb = np.zeros((3, Wp * cin, ncols), np.float32)
    for dy in range(3):
        for py in range(2):
            ky = 4 + py - 2 * dy
            if not 0 <= ky < K:
                continue
            for xo in range(W):
                for dx in range(3):
                    xin = xo + dx
                    for px in range(2):
                        kx = 4 + px - 2 * dx
                        if not 0 <= kx < K:
                            continue
                        c0 = py * (2 * W * cout) + xo * (2 * cout) + px * cout
                        wb[dy, xin * cin:(xin + 1) * cin, c0:c0 + cout] = w[:, :, ky, kx]
    return wb.reshape(3 * Wp * cin, ncols)


def prepare_kernel_params(params, cfg):
    sz, nn0 = cfg['sz'], cfg['nn0']
    # Permute linear output columns so the kernel emits NHWC (y, x, c) order directly.
    perm = np.array([c * sz * sz + y * sz + x
                     for y in range(sz) for x in range(sz) for c in range(nn0)], np.int32)
    lw = np.asarray(params['linear_w'], np.float32)[:, perm]
    lb = np.asarray(params['linear_b'], np.float32)[perm]
    kp = {'lin_w': jnp.asarray(lw, jnp.bfloat16),
          'lin_b': jnp.asarray(lb[None, :], jnp.float32),
          'layers': []}
    metas = _layer_meta(cfg)
    for meta, blk in zip(metas[:-1], params['blocks']):
        _H, W, _Cin, Cout, _last = meta
        wb = _banded_convt_weight(blk['convT_w'], W)
        bct = np.tile(np.asarray(blk['convT_b'], np.float32), 4 * W)
        w1 = np.asarray(blk['conv1_w'], np.float32)[:, :, 0, 0].T       # (cin1, cout1)
        w1big = np.kron(np.eye(4 * W, dtype=np.float32), w1)            # per-pixel 1x1
        b1 = np.tile(np.asarray(blk['conv1_b'], np.float32), 4 * W)
        kp['layers'].append({
            'wb': jnp.asarray(wb, jnp.bfloat16),
            'bct': jnp.asarray(bct[None, :], jnp.float32),
            'w1': jnp.asarray(w1big, jnp.bfloat16),
            'b1': jnp.asarray(b1[None, :], jnp.float32)})
    _H, W, _Cin, _Cout, _last = metas[-1]
    kp['layers'].append({
        'wb': jnp.asarray(_banded_convt_weight(params['last_w'], W), jnp.bfloat16),
        'bct': jnp.asarray(
            np.tile(np.asarray(params['last_b'], np.float32), 4 * W)[None, :], jnp.float32)})
    return kp


# ---------------------------------------------------------------------------
# Generator parameters (deterministic synthetic init, PyTorch layouts) and forward.
# ---------------------------------------------------------------------------
def init_params(key, input_dim, n0g, imgsz, channels, depth=3, nodemul=2):
    K = 5
    nn0 = n0g * nodemul ** (depth - 1) * 4
    sz = imgsz // 2 ** depth

    def nrm(k, shape):
        return jax.random.normal(k, shape, jnp.float32) * 0.02

    keys = iter(jax.random.split(key, 4 * depth + 4))
    params = {
        'linear_w': nrm(next(keys), (input_dim, sz * sz * nn0)),   # stored as (in, out)
        'linear_b': nrm(next(keys), (sz * sz * nn0,)),
    }
    blocks = []
    nn = nn0
    for _ in range(depth - 1):
        blocks.append({
            'convT_w': nrm(next(keys), (nn, nn // nodemul, K, K)),             # (Cin,Cout,K,K)
            'convT_b': nrm(next(keys), (nn // nodemul,)),
            'conv1_w': nrm(next(keys), (nn // nodemul, nn // nodemul, 1, 1)),  # (Cout,Cin,1,1)
            'conv1_b': nrm(next(keys), (nn // nodemul,)),
        })
        nn //= nodemul
    params['blocks'] = blocks
    params['last_w'] = nrm(next(keys), (nn, channels, K, K))
    params['last_b'] = nrm(next(keys), (channels,))
    cfg = dict(nn0=nn0, sz=sz, K=K, stride=2, padding=2, output_padding=1,
               channels=channels, depth=depth, nodemul=nodemul, imgsz=imgsz)
    return params, cfg


def generator_forward(kparams, x, *, cfg):
    B, input_dim = x.shape
    sz, nn0, channels, depth = cfg['sz'], cfg['nn0'], cfg['channels'], cfg['depth']
    imgsz = sz * 2 ** depth
    metas = _layer_meta(cfg)

    arrays = [x.reshape(B, 1, input_dim).astype(jnp.bfloat16),
              kparams['lin_w'], kparams['lin_b']]
    in_specs = [pl.BlockSpec((1, 1, input_dim), lambda b: (b, 0, 0)),
                pl.BlockSpec(kparams['lin_w'].shape, lambda b: (0, 0)),
                pl.BlockSpec(kparams['lin_b'].shape, lambda b: (0, 0))]
    for meta, lyr in zip(metas, kparams['layers']):
        last = meta[4]
        arrays += [lyr['wb'], lyr['bct']]
        in_specs += [pl.BlockSpec(lyr['wb'].shape, lambda b: (0, 0)),
                     pl.BlockSpec(lyr['bct'].shape, lambda b: (0, 0))]
        if not last:
            arrays += [lyr['w1'], lyr['b1']]
            in_specs += [pl.BlockSpec(lyr['w1'].shape, lambda b: (0, 0)),
                         pl.BlockSpec(lyr['b1'].shape, lambda b: (0, 0))]

    # Per-layer padded activation scratch (all live only in VMEM).
    scratch = [pltpu.VMEM((m[0] + 2, (m[1] + 2) * m[2]), jnp.float32) for m in metas]

    kern = functools.partial(_fused_generator_kernel, layers=metas, sz=sz, nn0=nn0)
    out2d = pl.pallas_call(
        kern,
        out_shape=jax.ShapeDtypeStruct((B * imgsz, imgsz * channels), jnp.float32),
        grid=(B,),                                   # >= 2 parallel steps when B >= 2
        in_specs=in_specs,
        out_specs=pl.BlockSpec((imgsz, imgsz * channels), lambda b: (b, 0)),
        scratch_shapes=scratch,
        compiler_params=pltpu.CompilerParams(
            dimension_semantics=("parallel",)),
    )(*arrays)
    # Output rows are image rows (NHWC lane order); final (tiny) relayout to NCHW.
    return out2d.reshape(B, imgsz, imgsz, channels).transpose(0, 3, 1, 2)


# ---------------------------------------------------------------------------
# Pure-JAX f32 reference (lax conv) used only as a correctness check.
# ---------------------------------------------------------------------------
def _upsample_and_pad(x, stride, pad_lo, pad_hi):
    N, H, W, C = x.shape
    up = jnp.zeros((N, (H - 1) * stride + 1, (W - 1) * stride + 1, C), x.dtype)
    up = up.at[:, ::stride, ::stride, :].set(x)
    return jnp.pad(up, ((0, 0), (pad_lo, pad_hi), (pad_lo, pad_hi), (0, 0)))


def reference_forward(params, cfg, x):
    dn = ('NHWC', 'HWIO', 'NHWC')
    hi = jax.lax.Precision.HIGHEST

    def convT(h, w_iohw, b):
        K = w_iohw.shape[2]
        w = jnp.transpose(jnp.flip(w_iohw, axis=(2, 3)), (2, 3, 0, 1))
        hp = _upsample_and_pad(h, cfg['stride'],
                               K - 1 - cfg['padding'],
                               K - 1 - cfg['padding'] + cfg['output_padding'])
        return jax.lax.conv_general_dilated(hp, w, (1, 1), 'VALID',
                                            dimension_numbers=dn, precision=hi) + b

    def conv1(h, w_oihw, b):
        w = jnp.transpose(w_oihw, (2, 3, 1, 0))
        return jax.lax.conv_general_dilated(h, w, (1, 1), 'VALID',
                                            dimension_numbers=dn, precision=hi) + b

    B = x.shape[0]
    h = x @ params['linear_w'] + params['linear_b']
    h = h.reshape(B, cfg['nn0'], cfg['sz'], cfg['sz']).transpose(0, 2, 3, 1)
    for blk in params['blocks']:
        h = convT(jax.nn.relu(h), blk['convT_w'], blk['convT_b'])
        h = conv1(jax.nn.relu(h), blk['conv1_w'], blk['conv1_b'])
    out = jnp.tanh(convT(jax.nn.relu(h), params['last_w'], params['last_b']))
    return out.transpose(0, 3, 1, 2)


if __name__ == "__main__":
    key = jax.random.PRNGKey(0)
    kp_key, kx = jax.random.split(key)

    # Small config: Generator(input_dim=32, n0g=2, imgsz=16, channels=3,
    #                         norm_type='none', requires_grad=True)
    B, input_dim, n0g, imgsz, channels = 2, 32, 2, 16, 3
    params, cfg = init_params(kp_key, input_dim, n0g, imgsz, channels)
    kparams = prepare_kernel_params(params, cfg)

    x = jax.random.normal(kx, (B, input_dim), jnp.float32)

    fwd = jax.jit(functools.partial(generator_forward, cfg=cfg))
    out = jax.block_until_ready(fwd(kparams, x))
    assert out.shape == (B, channels, imgsz, imgsz), out.shape
    assert out.dtype == jnp.float32

    ref = reference_forward(params, cfg, x)
    # bf16 weights / matmul inputs with f32 accumulation -> loose-but-meaningful tolerance.
    np.testing.assert_allclose(np.asarray(out), np.asarray(ref), atol=1e-2, rtol=1e-1)

    print("KERNEL_OK")
</pallas_src>

<mosaic_0001>
module attributes {stable_mosaic.version = 11 : i64} {
  func.func @_fused_generator_kernel(%arg0: i32, %arg1: memref<1x1x32xbf16, #tpu.memory_space<vmem>>, %arg2: memref<32x128xbf16, #tpu.memory_space<vmem>>, %arg3: memref<1x128xf32, #tpu.memory_space<vmem>>, %arg4: memref<384x128xbf16, #tpu.memory_space<vmem>>, %arg5: memref<1x128xf32, #tpu.memory_space<vmem>>, %arg6: memref<128x128xbf16, #tpu.memory_space<vmem>>, %arg7: memref<1x128xf32, #tpu.memory_space<vmem>>, %arg8: memref<288x128xbf16, #tpu.memory_space<vmem>>, %arg9: memref<1x128xf32, #tpu.memory_space<vmem>>, %arg10: memref<128x128xbf16, #tpu.memory_space<vmem>>, %arg11: memref<1x128xf32, #tpu.memory_space<vmem>>, %arg12: memref<240x96xbf16, #tpu.memory_space<vmem>>, %arg13: memref<1x96xf32, #tpu.memory_space<vmem>>, %arg14: memref<16x48xf32, #tpu.memory_space<vmem>>, %arg15: memref<4x128xf32, #tpu.memory_space<vmem>>, %arg16: memref<6x96xf32, #tpu.memory_space<vmem>>, %arg17: memref<10x80xf32, #tpu.memory_space<vmem>>) attributes {dimension_semantics = [#tpu.dimension_semantics<parallel>], iteration_bounds = array<i64: 2>, scalar_prefetch = 0 : i64, scratch_operands = 3 : i64, tpu.core_type = #tpu.core_type<tc>, window_params = [{transform_indices = @transform_0, window_bounds = array<i64: 1, 1, 32>}, {pipeline_mode = #tpu.pipeline_mode<synchronous>, transform_indices = @transform_1, window_bounds = array<i64: 32, 128>}, {pipeline_mode = #tpu.pipeline_mode<synchronous>, transform_indices = @transform_2, window_bounds = array<i64: 1, 128>}, {pipeline_mode = #tpu.pipeline_mode<synchronous>, transform_indices = @transform_3, window_bounds = array<i64: 384, 128>}, {pipeline_mode = #tpu.pipeline_mode<synchronous>, transform_indices = @transform_4, window_bounds = array<i64: 1, 128>}, {pipeline_mode = #tpu.pipeline_mode<synchronous>, transform_indices = @transform_5, window_bounds = array<i64: 128, 128>}, {pipeline_mode = #tpu.pipeline_mode<synchronous>, transform_indices = @transform_6, window_bounds = array<i64: 1, 128>}, {pipeline_mode = #tpu.pipeline_mode<synchronous>, transform_indices = @transform_7, window_bounds = array<i64: 288, 128>}, {pipeline_mode = #tpu.pipeline_mode<synchronous>, transform_indices = @transform_8, window_bounds = array<i64: 1, 128>}, {pipeline_mode = #tpu.pipeline_mode<synchronous>, transform_indices = @transform_9, window_bounds = array<i64: 128, 128>}, {pipeline_mode = #tpu.pipeline_mode<synchronous>, transform_indices = @transform_10, window_bounds = array<i64: 1, 128>}, {pipeline_mode = #tpu.pipeline_mode<synchronous>, transform_indices = @transform_11, window_bounds = array<i64: 240, 96>}, {pipeline_mode = #tpu.pipeline_mode<synchronous>, transform_indices = @transform_12, window_bounds = array<i64: 1, 96>}, {transform_indices = @transform_13, window_bounds = array<i64: 16, 48>}]} {
    %c0 = arith.constant 0 : index
    %c0_0 = arith.constant 0 : index
    %c0_1 = arith.constant 0 : index
    %0 = vector.load %arg1[%c0, %c0_0, %c0_1] : memref<1x1x32xbf16, #tpu.memory_space<vmem>>, vector<1x1x32xbf16>
    %1 = vector.shape_cast %0 : vector<1x1x32xbf16> to vector<1x32xbf16>
    %c0_2 = arith.constant 0 : index
    %c0_3 = arith.constant 0 : index
    %2 = vector.load %arg2[%c0_2, %c0_3] : memref<32x128xbf16, #tpu.memory_space<vmem>>, vector<32x128xbf16>
    %cst = arith.constant dense<0.000000e+00> : vector<1x128xf32>
    %3 = tpu.matmul %1, %2, %cst {dimension_numbers = #tpu.dot_dimension_numbers<[1], [0], [0], [1], [0, 0, 1, 1], [], []>} : vector<1x32xbf16>, vector<32x128xbf16>, vector<1x128xf32> -> vector<1x128xf32>
    %c0_4 = arith.constant 0 : index
    %c0_5 = arith.constant 0 : index
    %4 = vector.load %arg3[%c0_4, %c0_5] : memref<1x128xf32, #tpu.memory_space<vmem>>, vector<1x128xf32>
    %5 = arith.addf %3, %4 : vector<1x128xf32>
    %cst_6 = arith.constant 0.000000e+00 : f32
    %6 = vector.broadcast %cst_6 : f32 to vector<1x128xf32>
    %7 = arith.maximumf %5, %6 : vector<1x128xf32>
    %cst_7 = arith.constant 0.000000e+00 : f32
    %8 = vector.broadcast %cst_7 : f32 to vector<4x128xf32>
    %c0_8 = arith.constant 0 : index
    %c0_9 = arith.constant 0 : index
    %9 = vector.load %arg15[%c0_8, %c0_9] : memref<4x128xf32, #tpu.memory_space<vmem>>, vector<4x128xf32>
    tpu.vector_store %arg15[%c0_8, %c0_9], %8 {strides = array<i32>} : memref<4x128xf32, #tpu.memory_space<vmem>>, vector<4x128xf32>,
    %10 = vector.extract_strided_slice %7 {offsets = [0, 0], sizes = [1, 64], strides = [1, 1]} : vector<1x128xf32> to vector<1x64xf32>
    %c1 = arith.constant 1 : index
    %c32 = arith.constant 32 : index
    %11 = vector.load %arg15[%c1, %c32] : memref<4x128xf32, #tpu.memory_space<vmem>>, vector<1x64xf32>
    tpu.vector_store %arg15[%c1, %c32], %10 {strides = array<i32>} : memref<4x128xf32, #tpu.memory_space<vmem>>, vector<1x64xf32>,
    %12 = vector.extract_strided_slice %7 {offsets = [0, 64], sizes = [1, 64], strides = [1, 1]} : vector<1x128xf32> to vector<1x64xf32>
    %c2 = arith.constant 2 : index
    %c32_10 = arith.constant 32 : index
    %13 = vector.load %arg15[%c2, %c32_10] : memref<4x128xf32, #tpu.memory_space<vmem>>, vector<1x64xf32>
    tpu.vector_store %arg15[%c2, %c32_10], %12 {strides = array<i32>} : memref<4x128xf32, #tpu.memory_space<vmem>>, vector<1x64xf32>,
    %c0_11 = arith.constant 0 : index
    %c0_12 = arith.constant 0 : index
    %14 = vector.load %arg5[%c0_11, %c0_12] : memref<1x128xf32, #tpu.memory_space<vmem>>, vector<1x128xf32>
    %c0_13 = arith.constant 0 : index
    %c0_14 = arith.constant 0 : index
    %15 = vector.load %arg15[%c0_13, %c0_14] : memref<4x128xf32, #tpu.memory_space<vmem>>, vector<2x128xf32>
    %16 = arith.truncf %15 : vector<2x128xf32> to vector<2x128xbf16>
    %c0_15 = arith.constant 0 : index
    %c0_16 = arith.constant 0 : index
    %17 = vector.load %arg4[%c0_15, %c0_16] : memref<384x128xbf16, #tpu.memory_space<vmem>>, vector<128x128xbf16>
    %cst_17 = arith.constant dense<0.000000e+00> : vector<2x128xf32>
    %18 = tpu.matmul %16, %17, %cst_17 {dimension_numbers = #tpu.dot_dimension_numbers<[1], [0], [0], [1], [0, 0, 1, 1], [], []>} : vector<2x128xbf16>, vector<128x128xbf16>, vector<2x128xf32> -> vector<2x128xf32>
    %19 = vector.broadcast %14 : vector<1x128xf32> to vector<2x128xf32>
    %20 = arith.addf %19, %18 : vector<2x128xf32>
    %c1_18 = arith.constant 1 : index
    %c0_19 = arith.constant 0 : index
    %21 = vector.load %arg15[%c1_18, %c0_19] : memref<4x128xf32, #tpu.memory_space<vmem>>, vector<2x128xf32>
    %22 = arith.truncf %21 : vector<2x128xf32> to vector<2x128xbf16>
    %c128 = arith.constant 128 : index
    %c0_20 = arith.constant 0 : index
    %23 = vector.load %arg4[%c128, %c0_20] : memref<384x128xbf16, #tpu.memory_space<vmem>>, vector<128x128xbf16>
    %cst_21 = arith.constant dense<0.000000e+00> : vector<2x128xf32>
    %24 = tpu.matmul %22, %23, %cst_21 {dimension_numbers = #tpu.dot_dimension_numbers<[1], [0], [0], [1], [0, 0, 1, 1], [], []>} : vector<2x128xbf16>, vector<128x128xbf16>, vector<2x128xf32> -> vector<2x128xf32>
    %25 = arith.addf %20, %24 : vector<2x128xf32>
    %c2_22 = arith.constant 2 : index
    %c0_23 = arith.constant 0 : index
    %26 = vector.load %arg15[%c2_22, %c0_23] : memref<4x128xf32, #tpu.memory_space<vmem>>, vector<2x128xf32>
    %27 = arith.truncf %26 : vector<2x128xf32> to vector<2x128xbf16>
    %c256 = arith.constant 256 : index
    %c0_24 = arith.constant 0 : index
    %28 = vector.load %arg4[%c256, %c0_24] : memref<384x128xbf16, #tpu.memory_space<vmem>>, vector<128x128xbf16>
    %cst_25 = arith.constant dense<0.000000e+00> : vector<2x128xf32>
    %29 = tpu.matmul %27, %28, %cst_25 {dimension_numbers = #tpu.dot_dimension_numbers<[1], [0], [0], [1], [0, 0, 1, 1], [], []>} : vector<2x128xbf16>, vector<128x128xbf16>, vector<2x128xf32> -> vector<2x128xf32>
    %30 = arith.addf %25, %29 : vector<2x128xf32>
    %cst_26 = arith.constant 0.000000e+00 : f32
    %31 = vector.broadcast %cst_26 : f32 to vector<2x128xf32>
    %32 = arith.maximumf %30, %31 : vector<2x128xf32>
    %33 = arith.truncf %32 : vector<2x128xf32> to vector<2x128xbf16>
    %c0_27 = arith.constant 0 : index
    %c0_28 = arith.constant 0 : index
    %34 = vector.load %arg6[%c0_27, %c0_28] : memref<128x128xbf16, #tpu.memory_space<vmem>>, vector<128x128xbf16>
    %cst_29 = arith.constant dense<0.000000e+00> : vector<2x128xf32>
    %35 = tpu.matmul %33, %34, %cst_29 {dimension_numbers = #tpu.dot_dimension_numbers<[1], [0], [0], [1], [0, 0, 1, 1], [], []>} : vector<2x128xbf16>, vector<128x128xbf16>, vector<2x128xf32> -> vector<2x128xf32>
    %c0_30 = arith.constant 0 : index
    %c0_31 = arith.constant 0 : index
    %36 = vector.load %arg7[%c0_30, %c0_31] : memref<1x128xf32, #tpu.memory_space<vmem>>, vector<1x128xf32>
    %37 = vector.broadcast %36 : vector<1x128xf32> to vector<2x128xf32>
    %38 = arith.addf %35, %37 : vector<2x128xf32>
    %cst_32 = arith.constant 0.000000e+00 : f32
    %39 = vector.broadcast %cst_32 : f32 to vector<2x128xf32>
    %40 = arith.maximumf %38, %39 : vector<2x128xf32>
    %cst_33 = arith.constant 0.000000e+00 : f32
    %41 = vector.broadcast %cst_33 : f32 to vector<6x96xf32>
    %c0_34 = arith.constant 0 : index
    %c0_35 = arith.constant 0 : index
    %42 = vector.load %arg16[%c0_34, %c0_35] : memref<6x96xf32, #tpu.memory_space<vmem>>, vector<6x96xf32>
    tpu.vector_store %arg16[%c0_34, %c0_35], %41 {strides = array<i32>} : memref<6x96xf32, #tpu.memory_space<vmem>>, vector<6x96xf32>,
    %43 = vector.extract_strided_slice %40 {offsets = [0, 0], sizes = [2, 64], strides = [1, 1]} : vector<2x128xf32> to vector<2x64xf32>
    %44 = vector.extract_strided_slice %43 {offsets = [0, 0], sizes = [1, 64], strides = [1, 1]} : vector<2x64xf32> to vector<1x64xf32>
    %c1_36 = arith.constant 1 : index
    %c16 = arith.constant 16 : index
    %45 = vector.load %arg16[%c1_36, %c16] : memref<6x96xf32, #tpu.memory_space<vmem>>, vector<1x64xf32>
    tpu.vector_store %arg16[%c1_36, %c16], %44 {strides = array<i32>} : memref<6x96xf32, #tpu.memory_space<vmem>>, vector<1x64xf32>,
    %46 = vector.extract_strided_slice %43 {offsets = [1, 0], sizes = [1, 64], strides = [1, 1]} : vector<2x64xf32> to vector<1x64xf32>
    %c3 = arith.constant 3 : index
    %c16_37 = arith.constant 16 : index
    %47 = vector.load %arg16[%c3, %c16_37] : memref<6x96xf32, #tpu.memory_space<vmem>>, vector<1x64xf32>
    tpu.vector_store %arg16[%c3, %c16_37], %46 {strides = array<i32>} : memref<6x96xf32, #tpu.memory_space<vmem>>, vector<1x64xf32>,
    %48 = vector.extract_strided_slice %40 {offsets = [0, 64], sizes = [2, 64], strides = [1, 1]} : vector<2x128xf32> to vector<2x64xf32>
    %49 = vector.extract_strided_slice %48 {offsets = [0, 0], sizes = [1, 64], strides = [1, 1]} : vector<2x64xf32> to vector<1x64xf32>
    %c2_38 = arith.constant 2 : index
    %c16_39 = arith.constant 16 : index
    %50 = vector.load %arg16[%c2_38, %c16_39] : memref<6x96xf32, #tpu.memory_space<vmem>>, vector<1x64xf32>
    tpu.vector_store %arg16[%c2_38, %c16_39], %49 {strides = array<i32>} : memref<6x96xf32, #tpu.memory_space<vmem>>, vector<1x64xf32>,
    %51 = vector.extract_strided_slice %48 {offsets = [1, 0], sizes = [1, 64], strides = [1, 1]} : vector<2x64xf32> to vector<1x64xf32>
    %c4 = arith.constant 4 : index
    %c16_40 = arith.constant 16 : index
    %52 = vector.load %arg16[%c4, %c16_40] : memref<6x96xf32, #tpu.memory_space<vmem>>, vector<1x64xf32>
    tpu.vector_store %arg16[%c4, %c16_40], %51 {strides = array<i32>} : memref<6x96xf32, #tpu.memory_space<vmem>>, vector<1x64xf32>,
    %c0_41 = arith.constant 0 : index
    %c0_42 = arith.constant 0 : index
    %53 = vector.load %arg9[%c0_41, %c0_42] : memref<1x128xf32, #tpu.memory_space<vmem>>, vector<1x128xf32>
    %c0_43 = arith.constant 0 : index
    %c0_44 = arith.constant 0 : index
    %54 = vector.load %arg16[%c0_43, %c0_44] : memref<6x96xf32, #tpu.memory_space<vmem>>, vector<4x96xf32>
    %55 = arith.truncf %54 : vector<4x96xf32> to vector<4x96xbf16>
    %c0_45 = arith.constant 0 : index
    %c0_46 = arith.constant 0 : index
    %56 = vector.load %arg8[%c0_45, %c0_46] : memref<288x128xbf16, #tpu.memory_space<vmem>>, vector<96x128xbf16>
    %cst_47 = arith.constant dense<0.000000e+00> : vector<4x128xf32>
    %57 = tpu.matmul %55, %56, %cst_47 {dimension_numbers = #tpu.dot_dimension_numbers<[1], [0], [0], [1], [0, 0, 1, 1], [], []>} : vector<4x96xbf16>, vector<96x128xbf16>, vector<4x128xf32> -> vector<4x128xf32>
    %58 = vector.broadcast %53 : vector<1x128xf32> to vector<4x128xf32>
    %59 = arith.addf %58, %57 : vector<4x128xf32>
    %c1_48 = arith.constant 1 : index
    %c0_49 = arith.constant 0 : index
    %60 = vector.load %arg16[%c1_48, %c0_49] : memref<6x96xf32, #tpu.memory_space<vmem>>, vector<4x96xf32>
    %61 = arith.truncf %60 : vector<4x96xf32> to vector<4x96xbf16>
    %c96 = arith.constant 96 : index
    %c0_50 = arith.constant 0 : index
    %62 = vector.load %arg8[%c96, %c0_50] : memref<288x128xbf16, #tpu.memory_space<vmem>>, vector<96x128xbf16>
    %cst_51 = arith.constant dense<0.000000e+00> : vector<4x128xf32>
    %63 = tpu.matmul %61, %62, %cst_51 {dimension_numbers = #tpu.dot_dimension_numbers<[1], [0], [0], [1], [0, 0, 1, 1], [], []>} : vector<4x96xbf16>, vector<96x128xbf16>, vector<4x128xf32> -> vector<4x128xf32>
    %64 = arith.addf %59, %63 : vector<4x128xf32>
    %c2_52 = arith.constant 2 : index
    %c0_53 = arith.constant 0 : index
    %65 = vector.load %arg16[%c2_52, %c0_53] : memref<6x96xf32, #tpu.memory_space<vmem>>, vector<4x96xf32>
    %66 = arith.truncf %65 : vector<4x96xf32> to vector<4x96xbf16>
    %c192 = arith.constant 192 : index
    %c0_54 = arith.constant 0 : index
    %67 = vector.load %arg8[%c192, %c0_54] : memref<288x128xbf16, #tpu.memory_space<vmem>>, vector<96x128xbf16>
    %cst_55 = arith.constant dense<0.000000e+00> : vector<4x128xf32>
    %68 = tpu.matmul %66, %67, %cst_55 {dimension_numbers = #tpu.dot_dimension_numbers<[1], [0], [0], [1], [0, 0, 1, 1], [], []>} : vector<4x96xbf16>, vector<96x128xbf16>, vector<4x128xf32> -> vector<4x128xf32>
    %69 = arith.addf %64, %68 : vector<4x128xf32>
    %cst_56 = arith.constant 0.000000e+00 : f32
    %70 = vector.broadcast %cst_56 : f32 to vector<4x128xf32>
    %71 = arith.maximumf %69, %70 : vector<4x128xf32>
    %72 = arith.truncf %71 : vector<4x128xf32> to vector<4x128xbf16>
    %c0_57 = arith.constant 0 : index
    %c0_58 = arith.constant 0 : index
    %73 = vector.load %arg10[%c0_57, %c0_58] : memref<128x128xbf16, #tpu.memory_space<vmem>>, vector<128x128xbf16>
    %cst_59 = arith.constant dense<0.000000e+00> : vector<4x128xf32>
    %74 = tpu.matmul %72, %73, %cst_59 {dimension_numbers = #tpu.dot_dimension_numbers<[1], [0], [0], [1], [0, 0, 1, 1], [], []>} : vector<4x128xbf16>, vector<128x128xbf16>, vector<4x128xf32> -> vector<4x128xf32>
    %c0_60 = arith.constant 0 : index
    %c0_61 = arith.constant 0 : index
    %75 = vector.load %arg11[%c0_60, %c0_61] : memref<1x128xf32, #tpu.memory_space<vmem>>, vector<1x128xf32>
    %76 = vector.broadcast %75 : vector<1x128xf32> to vector<4x128xf32>
    %77 = arith.addf %74, %76 : vector<4x128xf32>
    %cst_62 = arith.constant 0.000000e+00 : f32
    %78 = vector.broadcast %cst_62 : f32 to vector<4x128xf32>
    %79 = arith.maximumf %77, %78 : vector<4x128xf32>
    %cst_63 = arith.constant 0.000000e+00 : f32
    %80 = vector.broadcast %cst_63 : f32 to vector<10x80xf32>
    %c0_64 = arith.constant 0 : index
    %c0_65 = arith.constant 0 : index
    %81 = vector.load %arg17[%c0_64, %c0_65] : memref<10x80xf32, #tpu.memory_space<vmem>>, vector<10x80xf32>
    tpu.vector_store %arg17[%c0_64, %c0_65], %80 {strides = array<i32>} : memref<10x80xf32, #tpu.memory_space<vmem>>, vector<10x80xf32>,
    %82 = vector.extract_strided_slice %79 {offsets = [0, 0], sizes = [4, 64], strides = [1, 1]} : vector<4x128xf32> to vector<4x64xf32>
    %83 = vector.extract_strided_slice %82 {offsets = [0, 0], sizes = [1, 64], strides = [1, 1]} : vector<4x64xf32> to vector<1x64xf32>
    %c1_66 = arith.constant 1 : index
    %c8 = arith.constant 8 : index
    %84 = vector.load %arg17[%c1_66, %c8] : memref<10x80xf32, #tpu.memory_space<vmem>>, vector<1x64xf32>
    tpu.vector_store %arg17[%c1_66, %c8], %83 {strides = array<i32>} : memref<10x80xf32, #tpu.memory_space<vmem>>, vector<1x64xf32>,
    %85 = vector.extract_strided_slice %82 {offsets = [1, 0], sizes = [1, 64], strides = [1, 1]} : vector<4x64xf32> to vector<1x64xf32>
    %c3_67 = arith.constant 3 : index
    %c8_68 = arith.constant 8 : index
    %86 = vector.load %arg17[%c3_67, %c8_68] : memref<10x80xf32, #tpu.memory_space<vmem>>, vector<1x64xf32>
    tpu.vector_store %arg17[%c3_67, %c8_68], %85 {strides = array<i32>} : memref<10x80xf32, #tpu.memory_space<vmem>>, vector<1x64xf32>,
    %87 = vector.extract_strided_slice %82 {offsets = [2, 0], sizes = [1, 64], strides = [1, 1]} : vector<4x64xf32> to vector<1x64xf32>
    %c5 = arith.constant 5 : index
    %c8_69 = arith.constant 8 : index
    %88 = vector.load %arg17[%c5, %c8_69] : memref<10x80xf32, #tpu.memory_space<vmem>>, vector<1x64xf32>
    tpu.vector_store %arg17[%c5, %c8_69], %87 {strides = array<i32>} : memref<10x80xf32, #tpu.memory_space<vmem>>, vector<1x64xf32>,
    %89 = vector.extract_strided_slice %82 {offsets = [3, 0], sizes = [1, 64], strides = [1, 1]} : vector<4x64xf32> to vector<1x64xf32>
    %c7 = arith.constant 7 : index
    %c8_70 = arith.constant 8 : index
    %90 = vector.load %arg17[%c7, %c8_70] : memref<10x80xf32, #tpu.memory_space<vmem>>, vector<1x64xf32>
    tpu.vector_store %arg17[%c7, %c8_70], %89 {strides = array<i32>} : memref<10x80xf32, #tpu.memory_space<vmem>>, vector<1x64xf32>,
    %91 = vector.extract_strided_slice %79 {offsets = [0, 64], sizes = [4, 64], strides = [1, 1]} : vector<4x128xf32> to vector<4x64xf32>
    %92 = vector.extract_strided_slice %91 {offsets = [0, 0], sizes = [1, 64], strides = [1, 1]} : vector<4x64xf32> to vector<1x64xf32>
    %c2_71 = arith.constant 2 : index
    %c8_72 = arith.constant 8 : index
    %93 = vector.load %arg17[%c2_71, %c8_72] : memref<10x80xf32, #tpu.memory_space<vmem>>, vector<1x64xf32>
    tpu.vector_store %arg17[%c2_71, %c8_72], %92 {strides = array<i32>} : memref<10x80xf32, #tpu.memory_space<vmem>>, vector<1x64xf32>,
    %94 = vector.extract_strided_slice %91 {offsets = [1, 0], sizes = [1, 64], strides = [1, 1]} : vector<4x64xf32> to vector<1x64xf32>
    %c4_73 = arith.constant 4 : index
    %c8_74 = arith.constant 8 : index
    %95 = vector.load %arg17[%c4_73, %c8_74] : memref<10x80xf32, #tpu.memory_space<vmem>>, vector<1x64xf32>
    tpu.vector_store %arg17[%c4_73, %c8_74], %94 {strides = array<i32>} : memref<10x80xf32, #tpu.memory_space<vmem>>, vector<1x64xf32>,
    %96 = vector.extract_strided_slice %91 {offsets = [2, 0], sizes = [1, 64], strides = [1, 1]} : vector<4x64xf32> to vector<1x64xf32>
    %c6 = arith.constant 6 : index
    %c8_75 = arith.constant 8 : index
    %97 = vector.load %arg17[%c6, %c8_75] : memref<10x80xf32, #tpu.memory_space<vmem>>, vector<1x64xf32>
    tpu.vector_store %arg17[%c6, %c8_75], %96 {strides = array<i32>} : memref<10x80xf32, #tpu.memory_space<vmem>>, vector<1x64xf32>,
    %98 = vector.extract_strided_slice %91 {offsets = [3, 0], sizes = [1, 64], strides = [1, 1]} : vector<4x64xf32> to vector<1x64xf32>
    %c8_76 = arith.constant 8 : index
    %c8_77 = arith.constant 8 : index
    %99 = vector.load %arg17[%c8_76, %c8_77] : memref<10x80xf32, #tpu.memory_space<vmem>>, vector<1x64xf32>
    tpu.vector_store %arg17[%c8_76, %c8_77], %98 {strides = array<i32>} : memref<10x80xf32, #tpu.memory_space<vmem>>, vector<1x64xf32>,
    %c0_78 = arith.constant 0 : index
    %c0_79 = arith.constant 0 : index
    %100 = vector.load %arg13[%c0_78, %c0_79] : memref<1x96xf32, #tpu.memory_space<vmem>>, vector<1x96xf32>
    %c0_80 = arith.constant 0 : index
    %c0_81 = arith.constant 0 : index
    %101 = vector.load %arg17[%c0_80, %c0_81] : memref<10x80xf32, #tpu.memory_space<vmem>>, vector<8x80xf32>
    %102 = arith.truncf %101 : vector<8x80xf32> to vector<8x80xbf16>
    %c0_82 = arith.constant 0 : index
    %c0_83 = arith.constant 0 : index
    %103 = vector.load %arg12[%c0_82, %c0_83] : memref<240x96xbf16, #tpu.memory_space<vmem>>, vector<80x96xbf16>
    %cst_84 = arith.constant dense<0.000000e+00> : vector<8x96xf32>
    %104 = tpu.matmul %102, %103, %cst_84 {dimension_numbers = #tpu.dot_dimension_numbers<[1], [0], [0], [1], [0, 0, 1, 1], [], []>} : vector<8x80xbf16>, vector<80x96xbf16>, vector<8x96xf32> -> vector<8x96xf32>
    %105 = vector.broadcast %100 : vector<1x96xf32> to vector<8x96xf32>
    %106 = arith.addf %105, %104 : vector<8x96xf32>
    %c1_85 = arith.constant 1 : index
    %c0_86 = arith.constant 0 : index
    %107 = vector.load %arg17[%c1_85, %c0_86] : memref<10x80xf32, #tpu.memory_space<vmem>>, vector<8x80xf32>
    %108 = arith.truncf %107 : vector<8x80xf32> to vector<8x80xbf16>
    %c80 = arith.constant 80 : index
    %c0_87 = arith.constant 0 : index
    %109 = vector.load %arg12[%c80, %c0_87] : memref<240x96xbf16, #tpu.memory_space<vmem>>, vector<80x96xbf16>
    %cst_88 = arith.constant dense<0.000000e+00> : vector<8x96xf32>
    %110 = tpu.matmul %108, %109, %cst_88 {dimension_numbers = #tpu.dot_dimension_numbers<[1], [0], [0], [1], [0, 0, 1, 1], [], []>} : vector<8x80xbf16>, vector<80x96xbf16>, vector<8x96xf32> -> vector<8x96xf32>
    %111 = arith.addf %106, %110 : vector<8x96xf32>
    %c2_89 = arith.constant 2 : index
    %c0_90 = arith.constant 0 : index
    %112 = vector.load %arg17[%c2_89, %c0_90] : memref<10x80xf32, #tpu.memory_space<vmem>>, vector<8x80xf32>
    %113 = arith.truncf %112 : vector<8x80xf32> to vector<8x80xbf16>
    %c160 = arith.constant 160 : index
    %c0_91 = arith.constant 0 : index
    %114 = vector.load %arg12[%c160, %c0_91] : memref<240x96xbf16, #tpu.memory_space<vmem>>, vector<80x96xbf16>
    %cst_92 = arith.constant dense<0.000000e+00> : vector<8x96xf32>
    %115 = tpu.matmul %113, %114, %cst_92 {dimension_numbers = #tpu.dot_dimension_numbers<[1], [0], [0], [1], [0, 0, 1, 1], [], []>} : vector<8x80xbf16>, vector<80x96xbf16>, vector<8x96xf32> -> vector<8x96xf32>
    %116 = arith.addf %111, %115 : vector<8x96xf32>
    %117 = math.tanh %116 : vector<8x96xf32>
    %118 = vector.extract_strided_slice %117 {offsets = [0, 0], sizes = [8, 48], strides = [1, 1]} : vector<8x96xf32> to vector<8x48xf32>
    %119 = vector.extract_strided_slice %118 {offsets = [0, 0], sizes = [1, 48], strides = [1, 1]} : vector<8x48xf32> to vector<1x48xf32>
    %c0_93 = arith.constant 0 : index
    %c0_94 = arith.constant 0 : index
    %120 = vector.load %arg14[%c0_93, %c0_94] : memref<16x48xf32, #tpu.memory_space<vmem>>, vector<1x48xf32>
    tpu.vector_store %arg14[%c0_93, %c0_94], %119 {strides = array<i32>} : memref<16x48xf32, #tpu.memory_space<vmem>>, vector<1x48xf32>,
    %121 = vector.extract_strided_slice %118 {offsets = [1, 0], sizes = [1, 48], strides = [1, 1]} : vector<8x48xf32> to vector<1x48xf32>
    %c2_95 = arith.constant 2 : index
    %c0_96 = arith.constant 0 : index
    %122 = vector.load %arg14[%c2_95, %c0_96] : memref<16x48xf32, #tpu.memory_space<vmem>>, vector<1x48xf32>
    tpu.vector_store %arg14[%c2_95, %c0_96], %121 {strides = array<i32>} : memref<16x48xf32, #tpu.memory_space<vmem>>, vector<1x48xf32>,
    %123 = vector.extract_strided_slice %118 {offsets = [2, 0], sizes = [1, 48], strides = [1, 1]} : vector<8x48xf32> to vector<1x48xf32>
    %c4_97 = arith.constant 4 : index
    %c0_98 = arith.constant 0 : index
    %124 = vector.load %arg14[%c4_97, %c0_98] : memref<16x48xf32, #tpu.memory_space<vmem>>, vector<1x48xf32>
    tpu.vector_store %arg14[%c4_97, %c0_98], %123 {strides = array<i32>} : memref<16x48xf32, #tpu.memory_space<vmem>>, vector<1x48xf32>,
    %125 = vector.extract_strided_slice %118 {offsets = [3, 0], sizes = [1, 48], strides = [1, 1]} : vector<8x48xf32> to vector<1x48xf32>
    %c6_99 = arith.constant 6 : index
    %c0_100 = arith.constant 0 : index
    %126 = vector.load %arg14[%c6_99, %c0_100] : memref<16x48xf32, #tpu.memory_space<vmem>>, vector<1x48xf32>
    tpu.vector_store %arg14[%c6_99, %c0_100], %125 {strides = array<i32>} : memref<16x48xf32, #tpu.memory_space<vmem>>, vector<1x48xf32>,
    %127 = vector.extract_strided_slice %118 {offsets = [4, 0], sizes = [1, 48], strides = [1, 1]} : vector<8x48xf32> to vector<1x48xf32>
    %c8_101 = arith.constant 8 : index
    %c0_102 = arith.constant 0 : index
    %128 = vector.load %arg14[%c8_101, %c0_102] : memref<16x48xf32, #tpu.memory_space<vmem>>, vector<1x48xf32>
    tpu.vector_store %arg14[%c8_101, %c0_102], %127 {strides = array<i32>} : memref<16x48xf32, #tpu.memory_space<vmem>>, vector<1x48xf32>,
    %129 = vector.extract_strided_slice %118 {offsets = [5, 0], sizes = [1, 48], strides = [1, 1]} : vector<8x48xf32> to vector<1x48xf32>
    %c10 = arith.constant 10 : index
    %c0_103 = arith.constant 0 : index
    %130 = vector.load %arg14[%c10, %c0_103] : memref<16x48xf32, #tpu.memory_space<vmem>>, vector<1x48xf32>
    tpu.vector_store %arg14[%c10, %c0_103], %129 {strides = array<i32>} : memref<16x48xf32, #tpu.memory_space<vmem>>, vector<1x48xf32>,
    %131 = vector.extract_strided_slice %118 {offsets = [6, 0], sizes = [1, 48], strides = [1, 1]} : vector<8x48xf32> to vector<1x48xf32>
    %c12 = arith.constant 12 : index
    %c0_104 = arith.constant 0 : index
    %132 = vector.load %arg14[%c12, %c0_104] : memref<16x48xf32, #tpu.memory_space<vmem>>, vector<1x48xf32>
    tpu.vector_store %arg14[%c12, %c0_104], %131 {strides = array<i32>} : memref<16x48xf32, #tpu.memory_space<vmem>>, vector<1x48xf32>,
    %133 = vector.extract_strided_slice %118 {offsets = [7, 0], sizes = [1, 48], strides = [1, 1]} : vector<8x48xf32> to vector<1x48xf32>
    %c14 = arith.constant 14 : index
    %c0_105 = arith.constant 0 : index
    %134 = vector.load %arg14[%c14, %c0_105] : memref<16x48xf32, #tpu.memory_space<vmem>>, vector<1x48xf32>
    tpu.vector_store %arg14[%c14, %c0_105], %133 {strides = array<i32>} : memref<16x48xf32, #tpu.memory_space<vmem>>, vector<1x48xf32>,
    %135 = vector.extract_strided_slice %117 {offsets = [0, 48], sizes = [8, 48], strides = [1, 1]} : vector<8x96xf32> to vector<8x48xf32>
    %136 = vector.extract_strided_slice %135 {offsets = [0, 0], sizes = [1, 48], strides = [1, 1]} : vector<8x48xf32> to vector<1x48xf32>
    %c1_106 = arith.constant 1 : index
    %c0_107 = arith.constant 0 : index
    %137 = vector.load %arg14[%c1_106, %c0_107] : memref<16x48xf32, #tpu.memory_space<vmem>>, vector<1x48xf32>
    tpu.vector_store %arg14[%c1_106, %c0_107], %136 {strides = array<i32>} : memref<16x48xf32, #tpu.memory_space<vmem>>, vector<1x48xf32>,
    %138 = vector.extract_strided_slice %135 {offsets = [1, 0], sizes = [1, 48], strides = [1, 1]} : vector<8x48xf32> to vector<1x48xf32>
    %c3_108 = arith.constant 3 : index
    %c0_109 = arith.constant 0 : index
    %139 = vector.load %arg14[%c3_108, %c0_109] : memref<16x48xf32, #tpu.memory_space<vmem>>, vector<1x48xf32>
    tpu.vector_store %arg14[%c3_108, %c0_109], %138 {strides = array<i32>} : memref<16x48xf32, #tpu.memory_space<vmem>>, vector<1x48xf32>,
    %140 = vector.extract_strided_slice %135 {offsets = [2, 0], sizes = [1, 48], strides = [1, 1]} : vector<8x48xf32> to vector<1x48xf32>
    %c5_110 = arith.constant 5 : index
    %c0_111 = arith.constant 0 : index
    %141 = vector.load %arg14[%c5_110, %c0_111] : memref<16x48xf32, #tpu.memory_space<vmem>>, vector<1x48xf32>
    tpu.vector_store %arg14[%c5_110, %c0_111], %140 {strides = array<i32>} : memref<16x48xf32, #tpu.memory_space<vmem>>, vector<1x48xf32>,
    %142 = vector.extract_strided_slice %135 {offsets = [3, 0], sizes = [1, 48], strides = [1, 1]} : vector<8x48xf32> to vector<1x48xf32>
    %c7_112 = arith.constant 7 : index
    %c0_113 = arith.constant 0 : index
    %143 = vector.load %arg14[%c7_112, %c0_113] : memref<16x48xf32, #tpu.memory_space<vmem>>, vector<1x48xf32>
    tpu.vector_store %arg14[%c7_112, %c0_113], %142 {strides = array<i32>} : memref<16x48xf32, #tpu.memory_space<vmem>>, vector<1x48xf32>,
    %144 = vector.extract_strided_slice %135 {offsets = [4, 0], sizes = [1, 48], strides = [1, 1]} : vector<8x48xf32> to vector<1x48xf32>
    %c9 = arith.constant 9 : index
    %c0_114 = arith.constant 0 : index
    %145 = vector.load %arg14[%c9, %c0_114] : memref<16x48xf32, #tpu.memory_space<vmem>>, vector<1x48xf32>
    tpu.vector_store %arg14[%c9, %c0_114], %144 {strides = array<i32>} : memref<16x48xf32, #tpu.memory_space<vmem>>, vector<1x48xf32>,
    %146 = vector.extract_strided_slice %135 {offsets = [5, 0], sizes = [1, 48], strides = [1, 1]} : vector<8x48xf32> to vector<1x48xf32>
    %c11 = arith.constant 11 : index
    %c0_115 = arith.constant 0 : index
    %147 = vector.load %arg14[%c11, %c0_115] : memref<16x48xf32, #tpu.memory_space<vmem>>, vector<1x48xf32>
    tpu.vector_store %arg14[%c11, %c0_115], %146 {strides = array<i32>} : memref<16x48xf32, #tpu.memory_space<vmem>>, vector<1x48xf32>,
    %148 = vector.extract_strided_slice %135 {offsets = [6, 0], sizes = [1, 48], strides = [1, 1]} : vector<8x48xf32> to vector<1x48xf32>
    %c13 = arith.constant 13 : index
    %c0_116 = arith.constant 0 : index
    %149 = vector.load %arg14[%c13, %c0_116] : memref<16x48xf32, #tpu.memory_space<vmem>>, vector<1x48xf32>
    tpu.vector_store %arg14[%c13, %c0_116], %148 {strides = array<i32>} : memref<16x48xf32, #tpu.memory_space<vmem>>, vector<1x48xf32>,
    %150 = vector.extract_strided_slice %135 {offsets = [7, 0], sizes = [1, 48], strides = [1, 1]} : vector<8x48xf32> to vector<1x48xf32>
    %c15 = arith.constant 15 : index
    %c0_117 = arith.constant 0 : index
    %151 = vector.load %arg14[%c15, %c0_117] : memref<16x48xf32, #tpu.memory_space<vmem>>, vector<1x48xf32>
    tpu.vector_store %arg14[%c15, %c0_117], %150 {strides = array<i32>} : memref<16x48xf32, #tpu.memory_space<vmem>>, vector<1x48xf32>,
    return
  }
  func.func @transform_0(%arg0: i32) -> (i32, i32, i32) {
    %c0_i32 = arith.constant 0 : i32
    %c0_i32_0 = arith.constant 0 : i32
    %c0_i32_1 = arith.constant 0 : i32
    return %arg0, %c0_i32, %c0_i32_0 : i32, i32, i32
  }
  func.func @transform_1(%arg0: i32) -> (i32, i32) {
    %c0_i32 = arith.constant 0 : i32
    %c0_i32_0 = arith.constant 0 : i32
    %c0_i32_1 = arith.constant 0 : i32
    return %c0_i32, %c0_i32_0 : i32, i32
  }
  func.func @transform_2(%arg0: i32) -> (i32, i32) {
    %c0_i32 = arith.constant 0 : i32
    %c0_i32_0 = arith.constant 0 : i32
    %c0_i32_1 = arith.constant 0 : i32
    return %c0_i32, %c0_i32_0 : i32, i32
  }
  func.func @transform_3(%arg0: i32) -> (i32, i32) {
    %c0_i32 = arith.constant 0 : i32
    %c0_i32_0 = arith.constant 0 : i32
    %c0_i32_1 = arith.constant 0 : i32
    return %c0_i32, %c0_i32_0 : i32, i32
  }
  func.func @transform_4(%arg0: i32) -> (i32, i32) {
    %c0_i32 = arith.constant 0 : i32
    %c0_i32_0 = arith.constant 0 : i32
    %c0_i32_1 = arith.constant 0 : i32
    return %c0_i32, %c0_i32_0 : i32, i32
  }
  func.func @transform_5(%arg0: i32) -> (i32, i32) {
    %c0_i32 = arith.constant 0 : i32
    %c0_i32_0 = arith.constant 0 : i32
    %c0_i32_1 = arith.constant 0 : i32
    return %c0_i32, %c0_i32_0 : i32, i32
  }
  func.func @transform_6(%arg0: i32) -> (i32, i32) {
    %c0_i32 = arith.constant 0 : i32
    %c0_i32_0 = arith.constant 0 : i32
    %c0_i32_1 = arith.constant 0 : i32
    return %c0_i32, %c0_i32_0 : i32, i32
  }
  func.func @transform_7(%arg0: i32) -> (i32, i32) {
    %c0_i32 = arith.constant 0 : i32
    %c0_i32_0 = arith.constant 0 : i32
    %c0_i32_1 = arith.constant 0 : i32
    return %c0_i32, %c0_i32_0 : i32, i32
  }
  func.func @transform_8(%arg0: i32) -> (i32, i32) {
    %c0_i32 = arith.constant 0 : i32
    %c0_i32_0 = arith.constant 0 : i32
    %c0_i32_1 = arith.constant 0 : i32
    return %c0_i32, %c0_i32_0 : i32, i32
  }
  func.func @transform_9(%arg0: i32) -> (i32, i32) {
    %c0_i32 = arith.constant 0 : i32
    %c0_i32_0 = arith.constant 0 : i32
    %c0_i32_1 = arith.constant 0 : i32
    return %c0_i32, %c0_i32_0 : i32, i32
  }
  func.func @transform_10(%arg0: i32) -> (i32, i32) {
    %c0_i32 = arith.constant 0 : i32
    %c0_i32_0 = arith.constant 0 : i32
    %c0_i32_1 = arith.constant 0 : i32
    return %c0_i32, %c0_i32_0 : i32, i32
  }
  func.func @transform_11(%arg0: i32) -> (i32, i32) {
    %c0_i32 = arith.constant 0 : i32
    %c0_i32_0 = arith.constant 0 : i32
    %c0_i32_1 = arith.constant 0 : i32
    return %c0_i32, %c0_i32_0 : i32, i32
  }
  func.func @transform_12(%arg0: i32) -> (i32, i32) {
    %c0_i32 = arith.constant 0 : i32
    %c0_i32_0 = arith.constant 0 : i32
    %c0_i32_1 = arith.constant 0 : i32
    return %c0_i32, %c0_i32_0 : i32, i32
  }
  func.func @transform_13(%arg0: i32) -> (i32, i32) {
    %c0_i32 = arith.constant 0 : i32
    %c0_i32_0 = arith.constant 0 : i32
    return %arg0, %c0_i32 : i32, i32
  }
}

</mosaic_0001>

<llo_original>
// kernel: generator_forward.1
$region0: #{generator_forward.1}
  #allocation0 [shape = 'u32[]', space=smem, size = 0x4, offset = 0x4, fixed_abs, tag = 'smem constant byte address 0x4 - core index']
  #allocation1 [shape = 'u32[72,128]{1,0:T(1,128)}', space=vmem, size = 0x9000, scoped, tag = 'internal scratch']
  #allocation2 [shape = 'f32[4,128]{1,0:T(4,128)}', space=vmem, size = 0x800, scoped, tag = 'scratch operand']
  #allocation3 [shape = 'f32[6,96]{1,0:T(8,128)}', space=vmem, size = 0x1000, scoped, tag = 'scratch operand']
  #allocation4 [shape = 'f32[10,80]{1,0:T(8,128)}', space=vmem, size = 0x2000, scoped, tag = 'scratch operand']
  %s0 = inlined_call_operand.vmem [shape: bf16[2,1,32], index: 0, kind: input, shape index: {}]
  %s1 = inlined_call_operand.vmem [shape: bf16[32,128], index: 1, kind: input, shape index: {}]
  %s2 = inlined_call_operand.vmem [shape: f32[1,128], index: 2, kind: input, shape index: {}]
  %s3 = inlined_call_operand.vmem [shape: bf16[384,128], index: 3, kind: input, shape index: {}]
  %s4 = inlined_call_operand.vmem [shape: f32[1,128], index: 4, kind: input, shape index: {}]
  %s5 = inlined_call_operand.hbm [shape: bf16[128,128], index: 5, kind: input, shape index: {}]
  %s6 = inlined_call_operand.vmem [shape: f32[1,128], index: 6, kind: input, shape index: {}]
  %s7 = inlined_call_operand.hbm [shape: bf16[288,128], index: 7, kind: input, shape index: {}]
  %s8 = inlined_call_operand.vmem [shape: f32[1,128], index: 8, kind: input, shape index: {}]
  %s9 = inlined_call_operand.hbm [shape: bf16[128,128], index: 9, kind: input, shape index: {}]
  %s10 = inlined_call_operand.vmem [shape: f32[1,128], index: 10, kind: input, shape index: {}]
  %s11 = inlined_call_operand.vmem [shape: bf16[240,96], index: 11, kind: input, shape index: {}]
  %s12 = inlined_call_operand.vmem [shape: f32[1,96], index: 12, kind: input, shape index: {}]
  %s13 = inlined_call_operand.vmem [shape: f32[32,48], index: 13, kind: output, shape index: {}]
  %s14 = sld [smem:[#allocation0]]
  $region97: #{generator_forward.1} parent=0
    _
  %s16 = ssub.s32 1, %s14
  %s17 = scalar_select 0, %s16, %s14
  $region1: #{generator_forward.1} parent=0
    #allocation5 [shape = 'u8[32768]{0}', space=vmem, size = 0x8000, scoped, tag = 'input window, operand 5, single buffered']
    #allocation6 [shape = 's32[2]{0}', space=sflag, size = 0x8, scoped, tag = 'scoped memory for generator_forward.1']
    #allocation7 [shape = 'u8[73728]{0}', space=vmem, size = 0x12000, scoped, tag = 'input window, operand 7, single buffered']
    #allocation8 [shape = 's32[1]{0}', space=sflag, size = 0x4, scoped, tag = 'scoped memory for generator_forward.1']
    #allocation9 [shape = 'u8[32768]{0}', space=vmem, size = 0x8000, scoped, tag = 'input window, operand 9, single buffered']
    %18 = vsyncpa [#allocation6], 0
    %19 = vsyncpa [#allocation8], 0
    loop: start=0, step=1, limit=4
    $region2: #{generator_forward.1} parent=1 // loop_pre_header
      _
    $region3: #{generator_forward.1} parent=1 // loop_header
      %s21 = sphi 0, %s25
      %p22 = scmp.ge.s32.totalorder %s21, 4
      %s31 = sphi 0, %s33
      %s34 = sphi 0, %s31
      %s35 = sphi 0, %s34
      %s51 = sphi 0, %s35
      %s55 = sphi 0, %s55
      %s57 = sphi 0, %s55
      %s58 = sphi 0, %s57
      %s72 = sphi 0, %s58
      %s76 = sphi 0, %s76
      %s78 = sphi 0, %s76
      %s79 = sphi 0, %s78
      %s93 = sphi 0, %s79
      %s97 = sphi 0, %s97
      %s99 = sphi 0, %s97
      %s100 = sphi 0, %s99
      %s114 = sphi 0, %s100
      %s118 = sphi 0, %s118
      %s120 = sphi 0, %s118
      %s121 = sphi 0, %s120
      %s135 = sphi 0, %s121
      %s139 = sphi 0, %s139
      %s141 = sphi 0, %s139
      %s142 = sphi 0, %s141
      %s156 = sphi 0, %s142
      %s160 = sphi 0, %s160
      %s162 = sphi 0, %s160
      %s163 = sphi 0, %s162
      %s177 = sphi 0, %s163
      %s181 = sphi 0, %s181
      %s183 = sphi 0, %s181
      %s184 = sphi 0, %s183
      %s198 = sphi 0, %s184
      %s202 = sphi 0, %s202
      %s204 = sphi 0, %s202
      %s205 = sphi 0, %s204
      %s219 = sphi 0, %s205
      %s223 = sphi 0, %s223
      %s225 = sphi 0, %s223
      %s226 = sphi 0, %s225
      %s240 = sphi 0, %s226
      %s244 = sphi 0, %s244
      %s246 = sphi 0, %s244
      %s247 = sphi 0, %s246
      %s261 = sphi 0, %s247
      %s265 = sphi 0, %s265
      %s267 = sphi 0, %s265
      %s268 = sphi 0, %s267
      %s282 = sphi 0, %s268
      %s286 = sphi 0, %s286
      %s288 = sphi 0, %s286
      %s289 = sphi 0, %s288
      %s303 = sphi 0, %s289
      %s309 = sphi 0, %s311
      %s312 = sphi 0, %s309
      %s313 = sphi 0, %s312
      %s329 = sphi 0, %s313
    $region4: #{generator_forward.1} parent=1 // loop_header_branch
      %24 = sbr.rel (%p22) target = $region8
    $region5: #{generator_forward.1} parent=1 // loop_body
      %s26 = ssub.s32 %s21, 1
      %s27 = ssub.s32 %s21, 2
      %s28 = sadd.s32 %s21, 1
      %s29 = ssub.s32 %s21, %s28
      %p30 = scmp.eq.s32.totalorder %s29, 0
      %s32 = sadd.s32 %s31, 1
      %s33 = scalar_select %p30, %s31, %s32
      %p36 = pneg %p30
      %p37 = scmp.eq.s32.totalorder %s21, 1
      %p38 = por %p36, %p37
      %p39 = scmp.ne.s32.totalorder %s31, %s34
      %p40 = scmp.eq.s32.totalorder %s21, 0
      %p41 = por %p39, %p40
      %p42 = scmp.ne.s32.totalorder %s31, %s34
      %p43 = scmp.eq.s32.totalorder %s26, 1
      %p44 = por %p42, %p43
      %p45 = scmp.ne.s32.totalorder %s34, %s35
      %p46 = scmp.eq.s32.totalorder %s26, 0
      %p47 = por %p45, %p46
      %p48 = scmp.ne.s32.totalorder %s34, %s35
      %p49 = scmp.eq.s32.totalorder %s27, 1
      %p50 = por %p48, %p49
      %p52 = scmp.ne.s32.totalorder %s35, %s51
      %p53 = scmp.eq.s32.totalorder %s27, 0
      %p54 = por %p52, %p53
      %s56 = sadd.s32 %s55, 1
      %p59 = scmp.eq.s32.totalorder %s21, 1
      %p60 = scmp.ne.s32.totalorder %s55, %s57
      %p61 = scmp.eq.s32.totalorder %s21, 0
      %p62 = por %p60, %p61
      %p63 = scmp.ne.s32.totalorder %s55, %s57
      %p64 = scmp.eq.s32.totalorder %s26, 1
      %p65 = por %p63, %p64
      %p66 = scmp.ne.s32.totalorder %s57, %s58
      %p67 = scmp.eq.s32.totalorder %s26, 0
      %p68 = por %p66, %p67
      %p69 = scmp.ne.s32.totalorder %s57, %s58
      %p70 = scmp.eq.s32.totalorder %s27, 1
      %p71 = por %p69, %p70
      %p73 = scmp.ne.s32.totalorder %s58, %s72
      %p74 = scmp.eq.s32.totalorder %s27, 0
      %p75 = por %p73, %p74
      %s77 = sadd.s32 %s76, 1
      %p80 = scmp.eq.s32.totalorder %s21, 1
      %p81 = scmp.ne.s32.totalorder %s76, %s78
      %p82 = scmp.eq.s32.totalorder %s21, 0
      %p83 = por %p81, %p82
      %p84 = scmp.ne.s32.totalorder %s76, %s78
      %p85 = scmp.eq.s32.totalorder %s26, 1
      %p86 = por %p84, %p85
      %p87 = scmp.ne.s32.totalorder %s78, %s79
      %p88 = scmp.eq.s32.totalorder %s26, 0
      %p89 = por %p87, %p88
      %p90 = scmp.ne.s32.totalorder %s78, %s79
      %p91 = scmp.eq.s32.totalorder %s27, 1
      %p92 = por %p90, %p91
      %p94 = scmp.ne.s32.totalorder %s79, %s93
      %p95 = scmp.eq.s32.totalorder %s27, 0
      %p96 = por %p94, %p95
      %s98 = sadd.s32 %s97, 1
      %p101 = scmp.eq.s32.totalorder %s21, 1
      %p102 = scmp.ne.s32.totalorder %s97, %s99
      %p103 = scmp.eq.s32.totalorder %s21, 0
      %p104 = por %p102, %p103
      %p105 = scmp.ne.s32.totalorder %s97, %s99
      %p106 = scmp.eq.s32.totalorder %s26, 1
      %p107 = por %p105, %p106
      %p108 = scmp.ne.s32.totalorder %s99, %s100
      %p109 = scmp.eq.s32.totalorder %s26, 0
      %p110 = por %p108, %p109
      %p111 = scmp.ne.s32.totalorder %s99, %s100
      %p112 = scmp.eq.s32.totalorder %s27, 1
      %p113 = por %p111, %p112
      %p115 = scmp.ne.s32.totalorder %s100, %s114
      %p116 = scmp.eq.s32.totalorder %s27, 0
      %p117 = por %p115, %p116
      %s119 = sadd.s32 %s118, 1
      %p122 = scmp.eq.s32.totalorder %s21, 1
      %p123 = scmp.ne.s32.totalorder %s118, %s120
      %p124 = scmp.eq.s32.totalorder %s21, 0
      %p125 = por %p123, %p124
      %p126 = scmp.ne.s32.totalorder %s118, %s120
      %p127 = scmp.eq.s32.totalorder %s26, 1
      %p128 = por %p126, %p127
      %p129 = scmp.ne.s32.totalorder %s120, %s121
      %p130 = scmp.eq.s32.totalorder %s26, 0
      %p131 = por %p129, %p130
      %p132 = scmp.ne.s32.totalorder %s120, %s121
      %p133 = scmp.eq.s32.totalorder %s27, 1
      %p134 = por %p132, %p133
      %p136 = scmp.ne.s32.totalorder %s121, %s135
      %p137 = scmp.eq.s32.totalorder %s27, 0
      %p138 = por %p136, %p137
      %s140 = sadd.s32 %s139, 1
      %p143 = scmp.eq.s32.totalorder %s21, 1
      %p144 = scmp.ne.s32.totalorder %s139, %s141
      %p145 = scmp.eq.s32.totalorder %s21, 0
      %p146 = por %p144, %p145
      %p147 = scmp.ne.s32.totalorder %s139, %s141
      %p148 = scmp.eq.s32.totalorder %s26, 1
      %p149 = por %p147, %p148
      %p150 = scmp.ne.s32.totalorder %s141, %s142
      %p151 = scmp.eq.s32.totalorder %s26, 0
      %p152 = por %p150, %p151
      %p153 = scmp.ne.s32.totalorder %s141, %s142
      %p154 = scmp.eq.s32.totalorder %s27, 1
      %p155 = por %p153, %p154
      %p157 = scmp.ne.s32.totalorder %s142, %s156
      %p158 = scmp.eq.s32.totalorder %s27, 0
      %p159 = por %p157, %p158
      %s161 = sadd.s32 %s160, 1
      %p164 = scmp.eq.s32.totalorder %s21, 1
      %p165 = scmp.ne.s32.totalorder %s160, %s162
      %p166 = scmp.eq.s32.totalorder %s21, 0
      %p167 = por %p165, %p166
      %p168 = scmp.ne.s32.totalorder %s160, %s162
      %p169 = scmp.eq.s32.totalorder %s26, 1
      %p170 = por %p168, %p169
      %p171 = scmp.ne.s32.totalorder %s162, %s163
      %p172 = scmp.eq.s32.totalorder %s26, 0
      %p173 = por %p171, %p172
      %p174 = scmp.ne.s32.totalorder %s162, %s163
      %p175 = scmp.eq.s32.totalorder %s27, 1
      %p176 = por %p174, %p175
      %p178 = scmp.ne.s32.totalorder %s163, %s177
      %p179 = scmp.eq.s32.totalorder %s27, 0
      %p180 = por %p178, %p179
      %s182 = sadd.s32 %s181, 1
      %p185 = scmp.eq.s32.totalorder %s21, 1
      %p186 = scmp.ne.s32.totalorder %s181, %s183
      %p187 = scmp.eq.s32.totalorder %s21, 0
      %p188 = por %p186, %p187
      %p189 = scmp.ne.s32.totalorder %s181, %s183
      %p190 = scmp.eq.s32.totalorder %s26, 1
      %p191 = por %p189, %p190
      %p192 = scmp.ne.s32.totalorder %s183, %s184
      %p193 = scmp.eq.s32.totalorder %s26, 0
      %p194 = por %p192, %p193
      %p195 = scmp.ne.s32.totalorder %s183, %s184
      %p196 = scmp.eq.s32.totalorder %s27, 1
      %p197 = por %p195, %p196
      %p199 = scmp.ne.s32.totalorder %s184, %s198
      %p200 = scmp.eq.s32.totalorder %s27, 0
      %p201 = por %p199, %p200
      %s203 = sadd.s32 %s202, 1
      %p206 = scmp.eq.s32.totalorder %s21, 1
      %p207 = scmp.ne.s32.totalorder %s202, %s204
      %p208 = scmp.eq.s32.totalorder %s21, 0
      %p209 = por %p207, %p208
      %p210 = scmp.ne.s32.totalorder %s202, %s204
      %p211 = scmp.eq.s32.totalorder %s26, 1
      %p212 = por %p210, %p211
      %p213 = scmp.ne.s32.totalorder %s204, %s205
      %p214 = scmp.eq.s32.totalorder %s26, 0
      %p215 = por %p213, %p214
      %p216 = scmp.ne.s32.totalorder %s204, %s205
      %p217 = scmp.eq.s32.totalorder %s27, 1
      %p218 = por %p216, %p217
      %p220 = scmp.ne.s32.totalorder %s205, %s219
      %p221 = scmp.eq.s32.totalorder %s27, 0
      %p222 = por %p220, %p221
      %s224 = sadd.s32 %s223, 1
      %p227 = scmp.eq.s32.totalorder %s21, 1
      %p228 = scmp.ne.s32.totalorder %s223, %s225
      %p229 = scmp.eq.s32.totalorder %s21, 0
      %p230 = por %p228, %p229
      %p231 = scmp.ne.s32.totalorder %s223, %s225
      %p232 = scmp.eq.s32.totalorder %s26, 1
      %p233 = por %p231, %p232
      %p234 = scmp.ne.s32.totalorder %s225, %s226
      %p235 = scmp.eq.s32.totalorder %s26, 0
      %p236 = por %p234, %p235
      %p237 = scmp.ne.s32.totalorder %s225, %s226
      %p238 = scmp.eq.s32.totalorder %s27, 1
      %p239 = por %p237, %p238
      %p241 = scmp.ne.s32.totalorder %s226, %s240
      %p242 = scmp.eq.s32.totalorder %s27, 0
      %p243 = por %p241, %p242
      %s245 = sadd.s32 %s244, 1
      %p248 = scmp.eq.s32.totalorder %s21, 1
      %p249 = scmp.ne.s32.totalorder %s244, %s246
      %p250 = scmp.eq.s32.totalorder %s21, 0
      %p251 = por %p249, %p250
      %p252 = scmp.ne.s32.totalorder %s244, %s246
      %p253 = scmp.eq.s32.totalorder %s26, 1
      %p254 = por %p252, %p253
      %p255 = scmp.ne.s32.totalorder %s246, %s247
      %p256 = scmp.eq.s32.totalorder %s26, 0
      %p257 = por %p255, %p256
      %p258 = scmp.ne.s32.totalorder %s246, %s247
      %p259 = scmp.eq.s32.totalorder %s27, 1
      %p260 = por %p258, %p259
      %p262 = scmp.ne.s32.totalorder %s247, %s261
      %p263 = scmp.eq.s32.totalorder %s27, 0
      %p264 = por %p262, %p263
      %s266 = sadd.s32 %s265, 1
      %p269 = scmp.eq.s32.totalorder %s21, 1
      %p270 = scmp.ne.s32.totalorder %s265, %s267
      %p271 = scmp.eq.s32.totalorder %s21, 0
      %p272 = por %p270, %p271
      %p273 = scmp.ne.s32.totalorder %s265, %s267
      %p274 = scmp.eq.s32.totalorder %s26, 1
      %p275 = por %p273, %p274
      %p276 = scmp.ne.s32.totalorder %s267, %s268
      %p277 = scmp.eq.s32.totalorder %s26, 0
      %p278 = por %p276, %p277
      %p279 = scmp.ne.s32.totalorder %s267, %s268
      %p280 = scmp.eq.s32.totalorder %s27, 1
      %p281 = por %p279, %p280
      %p283 = scmp.ne.s32.totalorder %s268, %s282
      %p284 = scmp.eq.s32.totalorder %s27, 0
      %p285 = por %p283, %p284
      %s287 = sadd.s32 %s286, 1
      %p290 = scmp.eq.s32.totalorder %s21, 1
      %p291 = scmp.ne.s32.totalorder %s286, %s288
      %p292 = scmp.eq.s32.totalorder %s21, 0
      %p293 = por %p291, %p292
      %p294 = scmp.ne.s32.totalorder %s286, %s288
      %p295 = scmp.eq.s32.totalorder %s26, 1
      %p296 = por %p294, %p295
      %p297 = scmp.ne.s32.totalorder %s288, %s289
      %p298 = scmp.eq.s32.totalorder %s26, 0
      %p299 = por %p297, %p298
      %p300 = scmp.ne.s32.totalorder %s288, %s289
      %p301 = scmp.eq.s32.totalorder %s27, 1
      %p302 = por %p300, %p301
      %p304 = scmp.ne.s32.totalorder %s289, %s303
      %p305 = scmp.eq.s32.totalorder %s27, 0
      %p306 = por %p304, %p305
      %s307 = ssub.s32 %s21, %s28
      %p308 = scmp.eq.s32.totalorder %s307, 0
      %s310 = sadd.s32 %s309, 1
      %s311 = scalar_select %p308, %s309, %s310
      %p314 = pneg %p308
      %p315 = scmp.eq.s32.totalorder %s21, 1
      %p316 = por %p314, %p315
      %p317 = scmp.ne.s32.totalorder %s309, %s312
      %p318 = scmp.eq.s32.totalorder %s21, 0
      %p319 = por %p317, %p318
      %p320 = scmp.ne.s32.totalorder %s309, %s312
      %p321 = scmp.eq.s32.totalorder %s26, 1
      %p322 = por %p320, %p321
      %p323 = scmp.ne.s32.totalorder %s312, %s313
      %p324 = scmp.eq.s32.totalorder %s26, 0
      %p325 = por %p323, %p324
      %p326 = scmp.ne.s32.totalorder %s312, %s313
      %p327 = scmp.eq.s32.totalorder %s27, 1
      %p328 = por %p326, %p327
      %p330 = scmp.ne.s32.totalorder %s313, %s329
      %p331 = scmp.eq.s32.totalorder %s27, 0
      %p332 = por %p330, %p331
      %p333 = scmp.le.s32.totalorder 1, %s21
      %p334 = scmp.lt.s32.totalorder %s21, 3
      %p335 = pnand %p333, %p334
      %p336 = pneg %p335
      // Predicated region
      $region9: #{generator_forward.1} parent=5 // pred_check
        _
      $region10: #{generator_forward.1} parent=5 // pred_check_branch
        %338 = sbr.rel (%p335) target = $region12
      $region11: #{generator_forward.1} parent=5 // pred_region
        %s339 = ssub.s32 %s21, 1
        // Predicated region
        $region13: #{generator_forward.1} parent=11 // pred_check
          %p340 = pneg %p68
        $region14: #{generator_forward.1} parent=11 // pred_check_branch
          %342 = sbr.rel (%p340) target = $region16
        $region15: #{generator_forward.1} parent=11 // pred_region
          _
        $region16: #{generator_forward.1} parent=11 // pred_fallthru
          _
        // Predicated region
        $region17: #{generator_forward.1} parent=11 // pred_check
          %p343 = pneg %p89
        $region18: #{generator_forward.1} parent=11 // pred_check_branch
          %345 = sbr.rel (%p343) target = $region20
        $region19: #{generator_forward.1} parent=11 // pred_region
          _
        $region20: #{generator_forward.1} parent=11 // pred_fallthru
          _
        // Predicated region
        $region21: #{generator_forward.1} parent=11 // pred_check
          %p346 = pneg %p110
        $region22: #{generator_forward.1} parent=11 // pred_check_branch
          %348 = sbr.rel (%p346) target = $region24
        $region23: #{generator_forward.1} parent=11 // pred_region
          _
        $region24: #{generator_forward.1} parent=11 // pred_fallthru
          _
        // Predicated region
        $region25: #{generator_forward.1} parent=11 // pred_check
          %p349 = pneg %p131
        $region26: #{generator_forward.1} parent=11 // pred_check_branch
          %351 = sbr.rel (%p349) target = $region28
        $region27: #{generator_forward.1} parent=11 // pred_region
          _
        $region28: #{generator_forward.1} parent=11 // pred_fallthru
          _
        // Predicated region
        $region29: #{generator_forward.1} parent=11 // pred_check
          %p352 = pneg %p152
        $region30: #{generator_forward.1} parent=11 // pred_check_branch
          %354 = sbr.rel (%p352) target = $region32
        $region31: #{generator_forward.1} parent=11 // pred_region
          %356 = vsyncadd [#allocation6], 0
          %s357 = sshll.u32 %s5, 4
          %s358 = int_to_ptr.hbm [resolvable:$true] %s357
          %s359 = sshll.u32 [#allocation5], 4
          %s360 = int_to_ptr.vmem [resolvable:$true] %s359
          %365 = dma.hbm_to_vmem [thread:$0]  %s358, 1024, %s360, [#allocation6], 64, 64, 4
        $region32: #{generator_forward.1} parent=11 // pred_fallthru
          _
        // Predicated region
        $region33: #{generator_forward.1} parent=11 // pred_check
          %p366 = pneg %p173
        $region34: #{generator_forward.1} parent=11 // pred_check_branch
          %368 = sbr.rel (%p366) target = $region36
        $region35: #{generator_forward.1} parent=11 // pred_region
          _
        $region36: #{generator_forward.1} parent=11 // pred_fallthru
          _
        // Predicated region
        $region37: #{generator_forward.1} parent=11 // pred_check
          %p369 = pneg %p194
        $region38: #{generator_forward.1} parent=11 // pred_check_branch
          %371 = sbr.rel (%p369) target = $region40
        $region39: #{generator_forward.1} parent=11 // pred_region
          %373 = vsyncadd [#allocation8], 0
          %s374 = sshll.u32 %s7, 4
          %s375 = int_to_ptr.hbm [resolvable:$true] %s374
          %s376 = sshll.u32 [#allocation7], 4
          %s377 = int_to_ptr.vmem [resolvable:$true] %s376
          %382 = dma.hbm_to_vmem [thread:$0]  %s375, 2304, %s377, [#allocation8], 64, 64, 4
        $region40: #{generator_forward.1} parent=11 // pred_fallthru
          _
        // Predicated region
        $region41: #{generator_forward.1} parent=11 // pred_check
          %p383 = pneg %p215
        $region42: #{generator_forward.1} parent=11 // pred_check_branch
          %385 = sbr.rel (%p383) target = $region44
        $region43: #{generator_forward.1} parent=11 // pred_region
          _
        $region44: #{generator_forward.1} parent=11 // pred_fallthru
          _
        // Predicated region
        $region45: #{generator_forward.1} parent=11 // pred_check
          %p386 = pneg %p236
        $region46: #{generator_forward.1} parent=11 // pred_check_branch
          %388 = sbr.rel (%p386) target = $region48
        $region47: #{generator_forward.1} parent=11 // pred_region
          %390 = vsyncadd [#allocation8], 0
          %s391 = sshll.u32 %s9, 4
          %s392 = int_to_ptr.hbm [resolvable:$true] %s391
          %s393 = sshll.u32 [#allocation9], 4
          %s394 = int_to_ptr.vmem [resolvable:$true] %s393
          %399 = dma.hbm_to_vmem [thread:$0]  %s392, 1024, %s394, [#allocation8], 64, 64, 4
        $region48: #{generator_forward.1} parent=11 // pred_fallthru
          _
        // Predicated region
        $region49: #{generator_forward.1} parent=11 // pred_check
          %p400 = pneg %p257
        $region50: #{generator_forward.1} parent=11 // pred_check_branch
          %402 = sbr.rel (%p400) target = $region52
        $region51: #{generator_forward.1} parent=11 // pred_region
          _
        $region52: #{generator_forward.1} parent=11 // pred_fallthru
          _
        // Predicated region
        $region53: #{generator_forward.1} parent=11 // pred_check
          %p403 = pneg %p278
        $region54: #{generator_forward.1} parent=11 // pred_check_branch
          %405 = sbr.rel (%p403) target = $region56
        $region55: #{generator_forward.1} parent=11 // pred_region
          _
        $region56: #{generator_forward.1} parent=11 // pred_fallthru
          _
        // Predicated region
        $region57: #{generator_forward.1} parent=11 // pred_check
          %p406 = pneg %p299
        $region58: #{generator_forward.1} parent=11 // pred_check_branch
          %408 = sbr.rel (%p406) target = $region60
        $region59: #{generator_forward.1} parent=11 // pred_region
          _
        $region60: #{generator_forward.1} parent=11 // pred_fallthru
          _
      $region12: #{generator_forward.1} parent=5 // pred_fallthru
        _
      %p409 = scmp.lt.s32.totalorder %s21, 2
      // Predicated region
      $region61: #{generator_forward.1} parent=5 // pred_check
        %p410 = pneg %p409
      $region62: #{generator_forward.1} parent=5 // pred_check_branch
        %412 = sbr.rel (%p410) target = $region64
      $region63: #{generator_forward.1} parent=5 // pred_region
        // Predicated region
        $region65: #{generator_forward.1} parent=63 // pred_check
          %p413 = pneg %p41
        $region66: #{generator_forward.1} parent=63 // pred_check_branch
          %415 = sbr.rel (%p413) target = $region68
        $region67: #{generator_forward.1} parent=63 // pred_region
          %p416 = scmp.lt.s32.totalorder %s21, 1
          %s417 = scalar_select %p416, %s21, 1
          %s418 = scalar_lea.vmem %s0, %s417
        $region68: #{generator_forward.1} parent=63 // pred_fallthru
          _
      $region64: #{generator_forward.1} parent=5 // pred_fallthru
        _
      %p419 = scmp.le.s32.totalorder 1, %s21
      %p420 = scmp.lt.s32.totalorder %s21, 3
      %p421 = pnand %p419, %p420
      %p422 = pneg %p421
      // Predicated region
      $region69: #{generator_forward.1} parent=5 // pred_check
        _
      $region70: #{generator_forward.1} parent=5 // pred_check_branch
        %424 = sbr.rel (%p421) target = $region72
      $region71: #{generator_forward.1} parent=5 // pred_region
        %s425 = ssub.s32 %s21, 1
        // Predicated region
        $region73: #{generator_forward.1} parent=71 // pred_check
          %p426 = pneg %p152
        $region74: #{generator_forward.1} parent=71 // pred_check_branch
          %428 = sbr.rel (%p426) target = $region76
        $region75: #{generator_forward.1} parent=71 // pred_region
          %430 = dma.done [#allocation6], 1024
        $region76: #{generator_forward.1} parent=71 // pred_fallthru
          _
        // Predicated region
        $region77: #{generator_forward.1} parent=71 // pred_check
          %p431 = pneg %p194
        $region78: #{generator_forward.1} parent=71 // pred_check_branch
          %433 = sbr.rel (%p431) target = $region80
        $region79: #{generator_forward.1} parent=71 // pred_region
          %435 = dma.done [#allocation8], 2304
        $region80: #{generator_forward.1} parent=71 // pred_fallthru
          _
        // Predicated region
        $region81: #{generator_forward.1} parent=71 // pred_check
          %p436 = pneg %p236
        $region82: #{generator_forward.1} parent=71 // pred_check_branch
          %438 = sbr.rel (%p436) target = $region84
        $region83: #{generator_forward.1} parent=71 // pred_region
          %440 = dma.done [#allocation8], 1024
        $region84: #{generator_forward.1} parent=71 // pred_fallthru
          _
        %p441 = scmp.lt.s32.totalorder %s26, 1
        %s442 = scalar_select %p441, %s26, 1
        %s443 = scalar_lea.vmem %s0, %s442
        %p444 = pneg %p47
        %p445 = pneg %p44
        %p446 = pneg %p68
        %p447 = pneg %p65
        %p448 = pneg %p89
        %p449 = pneg %p86
        %p450 = pneg %p110
        %p451 = pneg %p107
        %p452 = pneg %p131
        %p453 = pneg %p128
        %p454 = pneg %p152
        %p455 = pneg %p149
        %p456 = pneg %p173
        %p457 = pneg %p170
        %p458 = pneg %p194
        %p459 = pneg %p191
        %p460 = pneg %p215
        %p461 = pneg %p212
        %p462 = pneg %p236
        %p463 = pneg %p233
        %p464 = pneg %p257
        %p465 = pneg %p254
        %p466 = pneg %p278
        %p467 = pneg %p275
        %p468 = pneg %p299
        %p469 = pneg %p296
        %p470 = pneg %p325
        %p471 = pneg %p322
        %s472 = smul.u32 2, %s26
        %p473 = scmp.lt.s32.totalorder %s472, 3
        %s474 = scalar_select %p473, %s472, 3
        %s475 = smul.addr %s474, 8
        %s476 = scalar_lea.vmem %s13, %s475
        %p477 = scmp.lt.s32.totalorder %s26, 1
        %s478 = scalar_select %p477, %s26, 1
        %s479 = scalar_lea.vmem %s0, %s478
        %s480 = smul.u32 2, %s26
        %p481 = scmp.lt.s32.totalorder %s480, 3
        %s482 = scalar_select %p481, %s480, 3
        %s483 = smul.addr %s482, 8
        %s484 = scalar_lea.vmem %s13, %s483
        %s485 = smul.u32 2, %s26
        %v487 = vld [vmem:[%s479] sm:$0x1]
        %v488 = vld [vmem:[%s1] sm:$0xf]
        %v489 = vld [vmem:[%s1 + $0x4] sm:$0xf]
        %v490 = vld [vmem:[%s1 + $0x8] sm:$0xf]
        %v491 = vld [vmem:[%s1 + $0xc] sm:$0xf]
        %v492 = vld [vmem:[%s2] sm:$0x1]
        %v497 = vunpack.c.l.b16 %v488
        %v498 = vunpack.c.l.b16 %v489
        %v499 = vunpack.c.l.b16 %v490
        %v500 = vunpack.c.l.b16 %v491
        %v501 = vpack.c.b16 %v498, %v497
        %v502 = vpack.c.b16 %v500, %v499
        %vm505 = vcmask 261120
        %v507 = vsel %vm505, %v487, 0
        %509 = vmatpush.bf16.msra.mxu0 0
        %510 = vmatpush.bf16.msra.mxu0 0
        %511 = vmatpush.bf16.msra.mxu0 0
        %512 = vmatpush.bf16.msra.mxu0 0
        %513 = vmatpush.bf16.msra.mxu0 0
        %514 = vmatpush.bf16.msra.mxu0 0
        %515 = vmatpush.bf16.msra.mxu0 %v502
        %516 = vmatpush.bf16.msra.mxu0 %v501
        %517 = vmatmul.bf16.gmra.mxu0 %v507
        %v518 = vpop.f32.mrf.mxu0
        %v519 = vadd.f32 %v492, %v518
        %v520 = vpop.f32.mrf.mxu0
        %521 = vdwg.mxu0
        %v522 = vmax.f32 %v519, 0.0
        %523 = vst [vmem:[#allocation2] sm:$0xf] 0.0
        %525 = vrot.lane.b32.xlu0 %v522, 32
        %v526 = vpop.permute.xlu0 %525
        %vm528 = vcmask 778496
        %529 = vst.msk [vmem:[#allocation2 + $0x1] sm:$0x1] %vm528, %v526
        %530 = vrot.lane.b32.xlu0 %v522, 96
        %v531 = vpop.permute.xlu0 %530
        %533 = vst.msk [vmem:[#allocation2 + $0x2] sm:$0x1] %vm528, %v531
        %v534 = vld [vmem:[%s4] sm:$0x1]
        %v535 = vld [vmem:[#allocation2] sm:$0x3]
        %v536 = vpack.c.bf16 %v535, %v535
        %v537 = vld [vmem:[%s3] sm:$0xf]
        %v538 = vld [vmem:[%s3 + $0x4] sm:$0xf]
        %v539 = vld [vmem:[%s3 + $0x8] sm:$0xf]
        %v540 = vld [vmem:[%s3 + $0xc] sm:$0xf]
        %v541 = vld [vmem:[%s3 + $0x10] sm:$0xf]
        %v542 = vld [vmem:[%s3 + $0x14] sm:$0xf]
        %v543 = vld [vmem:[%s3 + $0x18] sm:$0xf]
        %v544 = vld [vmem:[%s3 + $0x1c] sm:$0xf]
        %v545 = vld [vmem:[%s3 + $0x20] sm:$0xf]
        %v546 = vld [vmem:[%s3 + $0x24] sm:$0xf]
        %v547 = vld [vmem:[%s3 + $0x28] sm:$0xf]
        %v548 = vld [vmem:[%s3 + $0x2c] sm:$0xf]
        %v549 = vld [vmem:[%s3 + $0x30] sm:$0xf]
        %v550 = vld [vmem:[%s3 + $0x34] sm:$0xf]
        %v551 = vld [vmem:[%s3 + $0x38] sm:$0xf]
        %v552 = vld [vmem:[%s3 + $0x3c] sm:$0xf]
        %v569 = vunpack.c.l.b16 %v537
        %v570 = vunpack.c.l.b16 %v538
        %v571 = vunpack.c.l.b16 %v539
        %v572 = vunpack.c.l.b16 %v540
        %v573 = vunpack.c.l.b16 %v541
        %v574 = vunpack.c.l.b16 %v542
        %v575 = vunpack.c.l.b16 %v543
        %v576 = vunpack.c.l.b16 %v544
        %v577 = vunpack.c.l.b16 %v545
        %v578 = vunpack.c.l.b16 %v546
        %v579 = vunpack.c.l.b16 %v547
        %v580 = vunpack.c.l.b16 %v548
        %v581 = vunpack.c.l.b16 %v549
        %v582 = vunpack.c.l.b16 %v550
        %v583 = vunpack.c.l.b16 %v551
        %v584 = vunpack.c.l.b16 %v552
        %v585 = vpack.c.b16 %v570, %v569
        %v586 = vpack.c.b16 %v572, %v571
        %v587 = vpack.c.b16 %v574, %v573
        %v588 = vpack.c.b16 %v576, %v575
        %v589 = vpack.c.b16 %v578, %v577
        %v590 = vpack.c.b16 %v580, %v579
        %v591 = vpack.c.b16 %v582, %v581
        %v592 = vpack.c.b16 %v584, %v583
        %601 = vmatpush.bf16.msra.mxu0 %v592
        %602 = vmatpush.bf16.msra.mxu0 %v591
        %603 = vmatpush.bf16.msra.mxu0 %v590
        %604 = vmatpush.bf16.msra.mxu0 %v589
        %605 = vmatpush.bf16.msra.mxu0 %v588
        %606 = vmatpush.bf16.msra.mxu0 %v587
        %607 = vmatpush.bf16.msra.mxu0 %v586
        %608 = vmatpush.bf16.msra.mxu0 %v585
        %609 = vmatmul.bf16.gmra.mxu0 %v536
        %v610 = vpop.f32.mrf.mxu0
        %v611 = vadd.f32 0.0, %v610
        %v612 = vpop.f32.mrf.mxu0
        %613 = vdwg.mxu0
        %v615 = vperm.slane %v534, 0
        %v617 = vadd.f32 %v615, %v611
        %v618 = vld [vmem:[#allocation2 + $0x1] sm:$0x3]
        %v619 = vpack.c.bf16 %v618, %v618
        %v620 = vld [vmem:[%s3 + $0x40] sm:$0xf]
        %v621 = vld [vmem:[%s3 + $0x44] sm:$0xf]
        %v622 = vld [vmem:[%s3 + $0x48] sm:$0xf]
        %v623 = vld [vmem:[%s3 + $0x4c] sm:$0xf]
        %v624 = vld [vmem:[%s3 + $0x50] sm:$0xf]
        %v625 = vld [vmem:[%s3 + $0x54] sm:$0xf]
        %v626 = vld [vmem:[%s3 + $0x58] sm:$0xf]
        %v627 = vld [vmem:[%s3 + $0x5c] sm:$0xf]
        %v628 = vld [vmem:[%s3 + $0x60] sm:$0xf]
        %v629 = vld [vmem:[%s3 + $0x64] sm:$0xf]
        %v630 = vld [vmem:[%s3 + $0x68] sm:$0xf]
        %v631 = vld [vmem:[%s3 + $0x6c] sm:$0xf]
        %v632 = vld [vmem:[%s3 + $0x70] sm:$0xf]
        %v633 = vld [vmem:[%s3 + $0x74] sm:$0xf]
        %v634 = vld [vmem:[%s3 + $0x78] sm:$0xf]
        %v635 = vld [vmem:[%s3 + $0x7c] sm:$0xf]
        %v652 = vunpack.c.l.b16 %v620
        %v653 = vunpack.c.l.b16 %v621
        %v654 = vunpack.c.l.b16 %v622
        %v655 = vunpack.c.l.b16 %v623
        %v656 = vunpack.c.l.b16 %v624
        %v657 = vunpack.c.l.b16 %v625
        %v658 = vunpack.c.l.b16 %v626
        %v659 = vunpack.c.l.b16 %v627
        %v660 = vunpack.c.l.b16 %v628
        %v661 = vunpack.c.l.b16 %v629
        %v662 = vunpack.c.l.b16 %v630
        %v663 = vunpack.c.l.b16 %v631
        %v664 = vunpack.c.l.b16 %v632
        %v665 = vunpack.c.l.b16 %v633
        %v666 = vunpack.c.l.b16 %v634
        %v667 = vunpack.c.l.b16 %v635
        %v668 = vpack.c.b16 %v653, %v652
        %v669 = vpack.c.b16 %v655, %v654
        %v670 = vpack.c.b16 %v657, %v656
        %v671 = vpack.c.b16 %v659, %v658
        %v672 = vpack.c.b16 %v661, %v660
        %v673 = vpack.c.b16 %v663, %v662
        %v674 = vpack.c.b16 %v665, %v664
        %v675 = vpack.c.b16 %v667, %v666
        %684 = vmatpush.bf16.msra.mxu0 %v675
        %685 = vmatpush.bf16.msra.mxu0 %v674
        %686 = vmatpush.bf16.msra.mxu0 %v673
        %687 = vmatpush.bf16.msra.mxu0 %v672
        %688 = vmatpush.bf16.msra.mxu0 %v671
        %689 = vmatpush.bf16.msra.mxu0 %v670
        %690 = vmatpush.bf16.msra.mxu0 %v669
        %691 = vmatpush.bf16.msra.mxu0 %v668
        %692 = vmatmul.bf16.gmra.mxu0 %v619
        %v693 = vpop.f32.mrf.mxu0
        %v694 = vadd.f32 0.0, %v693
        %v695 = vpop.f32.mrf.mxu0
        %696 = vdwg.mxu0
        %v697 = vadd.f32 %v617, %v694
        %v698 = vld [vmem:[#allocation2 + $0x2] sm:$0x3]
        %v699 = vpack.c.bf16 %v698, %v698
        %v700 = vld [vmem:[%s3 + $0x80] sm:$0xf]
        %v701 = vld [vmem:[%s3 + $0x84] sm:$0xf]
        %v702 = vld [vmem:[%s3 + $0x88] sm:$0xf]
        %v703 = vld [vmem:[%s3 + $0x8c] sm:$0xf]
        %v704 = vld [vmem:[%s3 + $0x90] sm:$0xf]
        %v705 = vld [vmem:[%s3 + $0x94] sm:$0xf]
        %v706 = vld [vmem:[%s3 + $0x98] sm:$0xf]
        %v707 = vld [vmem:[%s3 + $0x9c] sm:$0xf]
        %v708 = vld [vmem:[%s3 + $0xa0] sm:$0xf]
        %v709 = vld [vmem:[%s3 + $0xa4] sm:$0xf]
        %v710 = vld [vmem:[%s3 + $0xa8] sm:$0xf]
        %v711 = vld [vmem:[%s3 + $0xac] sm:$0xf]
        %v712 = vld [vmem:[%s3 + $0xb0] sm:$0xf]
        %v713 = vld [vmem:[%s3 + $0xb4] sm:$0xf]
        %v714 = vld [vmem:[%s3 + $0xb8] sm:$0xf]
        %v715 = vld [vmem:[%s3 + $0xbc] sm:$0xf]
        %v732 = vunpack.c.l.b16 %v700
        %v733 = vunpack.c.l.b16 %v701
        %v734 = vunpack.c.l.b16 %v702
        %v735 = vunpack.c.l.b16 %v703
        %v736 = vunpack.c.l.b16 %v704
        %v737 = vunpack.c.l.b16 %v705
        %v738 = vunpack.c.l.b16 %v706
        %v739 = vunpack.c.l.b16 %v707
        %v740 = vunpack.c.l.b16 %v708
        %v741 = vunpack.c.l.b16 %v709
        %v742 = vunpack.c.l.b16 %v710
        %v743 = vunpack.c.l.b16 %v711
        %v744 = vunpack.c.l.b16 %v712
        %v745 = vunpack.c.l.b16 %v713
        %v746 = vunpack.c.l.b16 %v714
        %v747 = vunpack.c.l.b16 %v715
        %v748 = vpack.c.b16 %v733, %v732
        %v749 = vpack.c.b16 %v735, %v734
        %v750 = vpack.c.b16 %v737, %v736
        %v751 = vpack.c.b16 %v739, %v738
        %v752 = vpack.c.b16 %v741, %v740
        %v753 = vpack.c.b16 %v743, %v742
        %v754 = vpack.c.b16 %v745, %v744
        %v755 = vpack.c.b16 %v747, %v746
        %764 = vmatpush.bf16.msra.mxu0 %v755
        %765 = vmatpush.bf16.msra.mxu0 %v754
        %766 = vmatpush.bf16.msra.mxu0 %v753
        %767 = vmatpush.bf16.msra.mxu0 %v752
        %768 = vmatpush.bf16.msra.mxu0 %v751
        %769 = vmatpush.bf16.msra.mxu0 %v750
        %770 = vmatpush.bf16.msra.mxu0 %v749
        %771 = vmatpush.bf16.msra.mxu0 %v748
        %772 = vmatmul.bf16.gmra.mxu0 %v699
        %v773 = vpop.f32.mrf.mxu0
        %v774 = vadd.f32 0.0, %v773
        %v775 = vpop.f32.mrf.mxu0
        %776 = vdwg.mxu0
        %v777 = vadd.f32 %v697, %v774
        %v778 = vmax.f32 %v777, 0.0
        %v779 = vpack.c.bf16 %v778, %v778
        %v780 = vld [vmem:[#allocation5] sm:$0xf]
        %v781 = vld [vmem:[#allocation5 + $0x4] sm:$0xf]
        %v782 = vld [vmem:[#allocation5 + $0x8] sm:$0xf]
        %v783 = vld [vmem:[#allocation5 + $0xc] sm:$0xf]
        %v784 = vld [vmem:[#allocation5 + $0x10] sm:$0xf]
        %v785 = vld [vmem:[#allocation5 + $0x14] sm:$0xf]
        %v786 = vld [vmem:[#allocation5 + $0x18] sm:$0xf]
        %v787 = vld [vmem:[#allocation5 + $0x1c] sm:$0xf]
        %v788 = vld [vmem:[#allocation5 + $0x20] sm:$0xf]
        %v789 = vld [vmem:[#allocation5 + $0x24] sm:$0xf]
        %v790 = vld [vmem:[#allocation5 + $0x28] sm:$0xf]
        %v791 = vld [vmem:[#allocation5 + $0x2c] sm:$0xf]
        %v792 = vld [vmem:[#allocation5 + $0x30] sm:$0xf]
        %v793 = vld [vmem:[#allocation5 + $0x34] sm:$0xf]
        %v794 = vld [vmem:[#allocation5 + $0x38] sm:$0xf]
        %v795 = vld [vmem:[#allocation5 + $0x3c] sm:$0xf]
        %v796 = vld [vmem:[%s6] sm:$0x1]
        %v798 = vperm.slane %v796, 0
        %v816 = vunpack.c.l.b16 %v780
        %v817 = vunpack.c.l.b16 %v781
        %v818 = vunpack.c.l.b16 %v782
        %v819 = vunpack.c.l.b16 %v783
        %v820 = vunpack.c.l.b16 %v784
        %v821 = vunpack.c.l.b16 %v785
        %v822 = vunpack.c.l.b16 %v786
        %v823 = vunpack.c.l.b16 %v787
        %v824 = vunpack.c.l.b16 %v788
        %v825 = vunpack.c.l.b16 %v789
        %v826 = vunpack.c.l.b16 %v790
        %v827 = vunpack.c.l.b16 %v791
        %v828 = vunpack.c.l.b16 %v792
        %v829 = vunpack.c.l.b16 %v793
        %v830 = vunpack.c.l.b16 %v794
        %v831 = vunpack.c.l.b16 %v795
        %v832 = vpack.c.b16 %v817, %v816
        %v833 = vpack.c.b16 %v819, %v818
        %v834 = vpack.c.b16 %v821, %v820
        %v835 = vpack.c.b16 %v823, %v822
        %v836 = vpack.c.b16 %v825, %v824
        %v837 = vpack.c.b16 %v827, %v826
        %v838 = vpack.c.b16 %v829, %v828
        %v839 = vpack.c.b16 %v831, %v830
        %848 = vmatpush.bf16.msra.mxu0 %v839
        %849 = vmatpush.bf16.msra.mxu0 %v838
        %850 = vmatpush.bf16.msra.mxu0 %v837
        %851 = vmatpush.bf16.msra.mxu0 %v836
        %852 = vmatpush.bf16.msra.mxu0 %v835
        %853 = vmatpush.bf16.msra.mxu0 %v834
        %854 = vmatpush.bf16.msra.mxu0 %v833
        %855 = vmatpush.bf16.msra.mxu0 %v832
        %856 = vmatmul.bf16.gmra.mxu0 %v779
        %v857 = vpop.f32.mrf.mxu0
        %v858 = vadd.f32 %v798, %v857
        %v859 = vpop.f32.mrf.mxu0
        %860 = vdwg.mxu0
        %v861 = vmax.f32 %v858, 0.0
        %vm862 = vcmask 783360
        %863 = vst.msk [vmem:[#allocation3] sm:$0x3f] %vm862, 0.0
        %865 = vrot.lane.b32.xlu0 %v861, 16
        %v866 = vpop.permute.xlu0 %865
        %vm868 = vcmask 647296
        %869 = vst.msk [vmem:[#allocation3 + $0x1] sm:$0x1] %vm868, %v866
        %vm870 = vcmask 648321
        %871 = vst.msk [vmem:[#allocation3 + $0x2] sm:$0x2] %vm870, %v866
        %872 = vrot.lane.b32.xlu0 %v861, 80
        %v873 = vpop.permute.xlu0 %872
        %875 = vst.msk [vmem:[#allocation3 + $0x2] sm:$0x1] %vm868, %v873
        %876 = vst.msk [vmem:[#allocation3 + $0x3] sm:$0x2] %vm870, %v873
        %v877 = vld [vmem:[%s8] sm:$0x1]
        %v878 = vld [vmem:[#allocation3] sm:$0xf]
        %v879 = vpack.c.bf16 %v878, %v878
        %v880 = vld [vmem:[#allocation7] sm:$0xf]
        %v881 = vld [vmem:[#allocation7 + $0x4] sm:$0xf]
        %v882 = vld [vmem:[#allocation7 + $0x8] sm:$0xf]
        %v883 = vld [vmem:[#allocation7 + $0xc] sm:$0xf]
        %v884 = vld [vmem:[#allocation7 + $0x10] sm:$0xf]
        %v885 = vld [vmem:[#allocation7 + $0x14] sm:$0xf]
        %v886 = vld [vmem:[#allocation7 + $0x18] sm:$0xf]
        %v887 = vld [vmem:[#allocation7 + $0x1c] sm:$0xf]
        %v888 = vld [vmem:[#allocation7 + $0x20] sm:$0xf]
        %v889 = vld [vmem:[#allocation7 + $0x24] sm:$0xf]
        %v890 = vld [vmem:[#allocation7 + $0x28] sm:$0xf]
        %v891 = vld [vmem:[#allocation7 + $0x2c] sm:$0xf]
        %v904 = vunpack.c.l.b16 %v880
        %v905 = vunpack.c.l.b16 %v881
        %v906 = vunpack.c.l.b16 %v882
        %v907 = vunpack.c.l.b16 %v883
        %v908 = vunpack.c.l.b16 %v884
        %v909 = vunpack.c.l.b16 %v885
        %v910 = vunpack.c.l.b16 %v886
        %v911 = vunpack.c.l.b16 %v887
        %v912 = vunpack.c.l.b16 %v888
        %v913 = vunpack.c.l.b16 %v889
        %v914 = vunpack.c.l.b16 %v890
        %v915 = vunpack.c.l.b16 %v891
        %v916 = vpack.c.b16 %v905, %v904
        %v917 = vpack.c.b16 %v907, %v906
        %v918 = vpack.c.b16 %v909, %v908
        %v919 = vpack.c.b16 %v911, %v910
        %v920 = vpack.c.b16 %v913, %v912
        %v921 = vpack.c.b16 %v915, %v914
        %vm928 = vcmask 785408
        %v930 = vsel %vm928, %v879, 0
        %932 = vmatpush.bf16.msra.mxu0 0
        %933 = vmatpush.bf16.msra.mxu0 0
        %934 = vmatpush.bf16.msra.mxu0 %v921
        %935 = vmatpush.bf16.msra.mxu0 %v920
        %936 = vmatpush.bf16.msra.mxu0 %v919
        %937 = vmatpush.bf16.msra.mxu0 %v918
        %938 = vmatpush.bf16.msra.mxu0 %v917
        %939 = vmatpush.bf16.msra.mxu0 %v916
        %940 = vmatmul.bf16.gmra.mxu0 %v930
        %v941 = vpop.f32.mrf.mxu0
        %v942 = vadd.f32 0.0, %v941
        %v943 = vpop.f32.mrf.mxu0
        %944 = vdwg.mxu0
        %v946 = vperm.slane %v877, 0
        %v948 = vadd.f32 %v946, %v942
        %v949 = vld [vmem:[#allocation3 + $0x1] sm:$0xf]
        %v950 = vpack.c.bf16 %v949, %v949
        %v951 = vld [vmem:[#allocation7 + $0x30] sm:$0xf]
        %v952 = vld [vmem:[#allocation7 + $0x34] sm:$0xf]
        %v953 = vld [vmem:[#allocation7 + $0x38] sm:$0xf]
        %v954 = vld [vmem:[#allocation7 + $0x3c] sm:$0xf]
        %v955 = vld [vmem:[#allocation7 + $0x40] sm:$0xf]
        %v956 = vld [vmem:[#allocation7 + $0x44] sm:$0xf]
        %v957 = vld [vmem:[#allocation7 + $0x48] sm:$0xf]
        %v958 = vld [vmem:[#allocation7 + $0x4c] sm:$0xf]
        %v959 = vld [vmem:[#allocation7 + $0x50] sm:$0xf]
        %v960 = vld [vmem:[#allocation7 + $0x54] sm:$0xf]
        %v961 = vld [vmem:[#allocation7 + $0x58] sm:$0xf]
        %v962 = vld [vmem:[#allocation7 + $0x5c] sm:$0xf]
        %v975 = vunpack.c.l.b16 %v951
        %v976 = vunpack.c.l.b16 %v952
        %v977 = vunpack.c.l.b16 %v953
        %v978 = vunpack.c.l.b16 %v954
        %v979 = vunpack.c.l.b16 %v955
        %v980 = vunpack.c.l.b16 %v956
        %v981 = vunpack.c.l.b16 %v957
        %v982 = vunpack.c.l.b16 %v958
        %v983 = vunpack.c.l.b16 %v959
        %v984 = vunpack.c.l.b16 %v960
        %v985 = vunpack.c.l.b16 %v961
        %v986 = vunpack.c.l.b16 %v962
        %v987 = vpack.c.b16 %v976, %v975
        %v988 = vpack.c.b16 %v978, %v977
        %v989 = vpack.c.b16 %v980, %v979
        %v990 = vpack.c.b16 %v982, %v981
        %v991 = vpack.c.b16 %v984, %v983
        %v992 = vpack.c.b16 %v986, %v985
        %v1000 = vsel %vm928, %v950, 0
        %1002 = vmatpush.bf16.msra.mxu0 0
        %1003 = vmatpush.bf16.msra.mxu0 0
        %1004 = vmatpush.bf16.msra.mxu0 %v992
        %1005 = vmatpush.bf16.msra.mxu0 %v991
        %1006 = vmatpush.bf16.msra.mxu0 %v990
        %1007 = vmatpush.bf16.msra.mxu0 %v989
        %1008 = vmatpush.bf16.msra.mxu0 %v988
        %1009 = vmatpush.bf16.msra.mxu0 %v987
        %1010 = vmatmul.bf16.gmra.mxu0 %v1000
        %v1011 = vpop.f32.mrf.mxu0
        %v1012 = vadd.f32 0.0, %v1011
        %v1013 = vpop.f32.mrf.mxu0
        %1014 = vdwg.mxu0
        %v1015 = vadd.f32 %v948, %v1012
        %v1016 = vld [vmem:[#allocation3 + $0x2] sm:$0xf]
        %v1017 = vpack.c.bf16 %v1016, %v1016
        %v1018 = vld [vmem:[#allocation7 + $0x60] sm:$0xf]
        %v1019 = vld [vmem:[#allocation7 + $0x64] sm:$0xf]
        %v1020 = vld [vmem:[#allocation7 + $0x68] sm:$0xf]
        %v1021 = vld [vmem:[#allocation7 + $0x6c] sm:$0xf]
        %v1022 = vld [vmem:[#allocation7 + $0x70] sm:$0xf]
        %v1023 = vld [vmem:[#allocation7 + $0x74] sm:$0xf]
        %v1024 = vld [vmem:[#allocation7 + $0x78] sm:$0xf]
        %v1025 = vld [vmem:[#allocation7 + $0x7c] sm:$0xf]
        %v1026 = vld [vmem:[#allocation7 + $0x80] sm:$0xf]
        %v1027 = vld [vmem:[#allocation7 + $0x84] sm:$0xf]
        %v1028 = vld [vmem:[#allocation7 + $0x88] sm:$0xf]
        %v1029 = vld [vmem:[#allocation7 + $0x8c] sm:$0xf]
        %v1042 = vunpack.c.l.b16 %v1018
        %v1043 = vunpack.c.l.b16 %v1019
        %v1044 = vunpack.c.l.b16 %v1020
        %v1045 = vunpack.c.l.b16 %v1021
        %v1046 = vunpack.c.l.b16 %v1022
        %v1047 = vunpack.c.l.b16 %v1023
        %v1048 = vunpack.c.l.b16 %v1024
        %v1049 = vunpack.c.l.b16 %v1025
        %v1050 = vunpack.c.l.b16 %v1026
        %v1051 = vunpack.c.l.b16 %v1027
        %v1052 = vunpack.c.l.b16 %v1028
        %v1053 = vunpack.c.l.b16 %v1029
        %v1054 = vpack.c.b16 %v1043, %v1042
        %v1055 = vpack.c.b16 %v1045, %v1044
        %v1056 = vpack.c.b16 %v1047, %v1046
        %v1057 = vpack.c.b16 %v1049, %v1048
        %v1058 = vpack.c.b16 %v1051, %v1050
        %v1059 = vpack.c.b16 %v1053, %v1052
        %v1067 = vsel %vm928, %v1017, 0
        %1069 = vmatpush.bf16.msra.mxu0 0
        %1070 = vmatpush.bf16.msra.mxu0 0
        %1071 = vmatpush.bf16.msra.mxu0 %v1059
        %1072 = vmatpush.bf16.msra.mxu0 %v1058
        %1073 = vmatpush.bf16.msra.mxu0 %v1057
        %1074 = vmatpush.bf16.msra.mxu0 %v1056
        %1075 = vmatpush.bf16.msra.mxu0 %v1055
        %1076 = vmatpush.bf16.msra.mxu0 %v1054
        %1077 = vmatmul.bf16.gmra.mxu0 %v1067
        %v1078 = vpop.f32.mrf.mxu0
        %v1079 = vadd.f32 0.0, %v1078
        %v1080 = vpop.f32.mrf.mxu0
        %1081 = vdwg.mxu0
        %v1082 = vadd.f32 %v1015, %v1079
        %v1083 = vmax.f32 %v1082, 0.0
        %v1084 = vpack.c.bf16 %v1083, %v1083
        %v1085 = vld [vmem:[#allocation9] sm:$0xf]
        %v1086 = vld [vmem:[#allocation9 + $0x4] sm:$0xf]
        %v1087 = vld [vmem:[#allocation9 + $0x8] sm:$0xf]
        %v1088 = vld [vmem:[#allocation9 + $0xc] sm:$0xf]
        %v1089 = vld [vmem:[#allocation9 + $0x10] sm:$0xf]
        %v1090 = vld [vmem:[#allocation9 + $0x14] sm:$0xf]
        %v1091 = vld [vmem:[#allocation9 + $0x18] sm:$0xf]
        %v1092 = vld [vmem:[#allocation9 + $0x1c] sm:$0xf]
        %v1093 = vld [vmem:[#allocation9 + $0x20] sm:$0xf]
        %v1094 = vld [vmem:[#allocation9 + $0x24] sm:$0xf]
        %v1095 = vld [vmem:[#allocation9 + $0x28] sm:$0xf]
        %v1096 = vld [vmem:[#allocation9 + $0x2c] sm:$0xf]
        %v1097 = vld [vmem:[#allocation9 + $0x30] sm:$0xf]
        %v1098 = vld [vmem:[#allocation9 + $0x34] sm:$0xf]
        %v1099 = vld [vmem:[#allocation9 + $0x38] sm:$0xf]
        %v1100 = vld [vmem:[#allocation9 + $0x3c] sm:$0xf]
        %v1101 = vld [vmem:[%s10] sm:$0x1]
        %v1103 = vperm.slane %v1101, 0
        %v1121 = vunpack.c.l.b16 %v1085
        %v1122 = vunpack.c.l.b16 %v1086
        %v1123 = vunpack.c.l.b16 %v1087
        %v1124 = vunpack.c.l.b16 %v1088
        %v1125 = vunpack.c.l.b16 %v1089
        %v1126 = vunpack.c.l.b16 %v1090
        %v1127 = vunpack.c.l.b16 %v1091
        %v1128 = vunpack.c.l.b16 %v1092
        %v1129 = vunpack.c.l.b16 %v1093
        %v1130 = vunpack.c.l.b16 %v1094
        %v1131 = vunpack.c.l.b16 %v1095
        %v1132 = vunpack.c.l.b16 %v1096
        %v1133 = vunpack.c.l.b16 %v1097
        %v1134 = vunpack.c.l.b16 %v1098
        %v1135 = vunpack.c.l.b16 %v1099
        %v1136 = vunpack.c.l.b16 %v1100
        %v1137 = vpack.c.b16 %v1122, %v1121
        %v1138 = vpack.c.b16 %v1124, %v1123
        %v1139 = vpack.c.b16 %v1126, %v1125
        %v1140 = vpack.c.b16 %v1128, %v1127
        %v1141 = vpack.c.b16 %v1130, %v1129
        %v1142 = vpack.c.b16 %v1132, %v1131
        %v1143 = vpack.c.b16 %v1134, %v1133
        %v1144 = vpack.c.b16 %v1136, %v1135
        %1153 = vmatpush.bf16.msra.mxu0 %v1144
        %1154 = vmatpush.bf16.msra.mxu0 %v1143
        %1155 = vmatpush.bf16.msra.mxu0 %v1142
        %1156 = vmatpush.bf16.msra.mxu0 %v1141
        %1157 = vmatpush.bf16.msra.mxu0 %v1140
        %1158 = vmatpush.bf16.msra.mxu0 %v1139
        %1159 = vmatpush.bf16.msra.mxu0 %v1138
        %1160 = vmatpush.bf16.msra.mxu0 %v1137
        %1161 = vmatmul.bf16.gmra.mxu0 %v1084
        %v1162 = vpop.f32.mrf.mxu0
        %v1163 = vadd.f32 %v1103, %v1162
        %v1164 = vpop.f32.mrf.mxu0
        %1165 = vdwg.mxu0
        %v1166 = vmax.f32 %v1163, 0.0
        %vm1167 = vcmask 654336
        %1168 = vst.msk [vmem:[#allocation4] sm:$0xff] %vm1167, 0.0
        %vm1169 = vcmask 648192
        %1170 = vst.msk [vmem:[#allocation4 + $0x8] sm:$0x3] %vm1169, 0.0
        %1172 = vrot.lane.b32.xlu0 %v1166, 8
        %v1173 = vpop.permute.xlu0 %1172
        %vm1175 = vcmask 581696
        %1176 = vst.msk [vmem:[#allocation4 + $0x1] sm:$0x1] %vm1175, %v1173
        %vm1177 = vcmask 582721
        %1178 = vst.msk [vmem:[#allocation4 + $0x2] sm:$0x2] %vm1177, %v1173
        %vm1179 = vcmask 583746
        %1180 = vst.msk [vmem:[#allocation4 + $0x3] sm:$0x4] %vm1179, %v1173
        %vm1181 = vcmask 584771
        %1182 = vst.msk [vmem:[#allocation4 + $0x4] sm:$0x8] %vm1181, %v1173
        %1183 = vrot.lane.b32.xlu0 %v1166, 72
        %v1184 = vpop.permute.xlu0 %1183
        %1186 = vst.msk [vmem:[#allocation4 + $0x2] sm:$0x1] %vm1175, %v1184
        %1187 = vst.msk [vmem:[#allocation4 + $0x3] sm:$0x2] %vm1177, %v1184
        %1188 = vst.msk [vmem:[#allocation4 + $0x4] sm:$0x4] %vm1179, %v1184
        %1189 = vst.msk [vmem:[#allocation4 + $0x5] sm:$0x8] %vm1181, %v1184
        %v1190 = vld [vmem:[%s12] sm:$0x1]
        %v1191 = vld [vmem:[#allocation4] sm:$0xff]
        %v1192 = vpack.c.bf16 %v1191, %v1191
        %v1193 = vld [vmem:[%s11] sm:$0xf]
        %v1194 = vld [vmem:[%s11 + $0x4] sm:$0xf]
        %v1195 = vld [vmem:[%s11 + $0x8] sm:$0xf]
        %v1196 = vld [vmem:[%s11 + $0xc] sm:$0xf]
        %v1197 = vld [vmem:[%s11 + $0x10] sm:$0xf]
        %v1198 = vld [vmem:[%s11 + $0x14] sm:$0xf]
        %v1199 = vld [vmem:[%s11 + $0x18] sm:$0xf]
        %v1200 = vld [vmem:[%s11 + $0x1c] sm:$0xf]
        %v1201 = vld [vmem:[%s11 + $0x20] sm:$0xf]
        %v1202 = vld [vmem:[%s11 + $0x24] sm:$0xf]
        %v1213 = vunpack.c.l.b16 %v1193
        %v1214 = vunpack.c.l.b16 %v1194
        %v1215 = vunpack.c.l.b16 %v1195
        %v1216 = vunpack.c.l.b16 %v1196
        %v1217 = vunpack.c.l.b16 %v1197
        %v1218 = vunpack.c.l.b16 %v1198
        %v1219 = vunpack.c.l.b16 %v1199
        %v1220 = vunpack.c.l.b16 %v1200
        %v1221 = vunpack.c.l.b16 %v1201
        %v1222 = vunpack.c.l.b16 %v1202
        %v1223 = vpack.c.b16 %v1214, %v1213
        %v1224 = vpack.c.b16 %v1216, %v1215
        %v1225 = vpack.c.b16 %v1218, %v1217
        %v1226 = vpack.c.b16 %v1220, %v1219
        %v1227 = vpack.c.b16 %v1222, %v1221
        %v1234 = vsel %vm1167, %v1192, 0
        %1236 = vmatpush.bf16.msra.mxu0 0
        %1237 = vmatpush.bf16.msra.mxu0 0
        %1238 = vmatpush.bf16.msra.mxu0 0
        %1239 = vmatpush.bf16.msra.mxu0 %v1227
        %1240 = vmatpush.bf16.msra.mxu0 %v1226
        %1241 = vmatpush.bf16.msra.mxu0 %v1225
        %1242 = vmatpush.bf16.msra.mxu0 %v1224
        %1243 = vmatpush.bf16.msra.mxu0 %v1223
        %1244 = vmatmul.bf16.gmra.mxu0 %v1234
        %v1245 = vpop.f32.mrf.mxu0
        %v1246 = vadd.f32 0.0, %v1245
        %v1247 = vpop.f32.mrf.mxu0
        %1248 = vdwg.mxu0
        %v1250 = vperm.slane %v1190, 0
        %v1252 = vadd.f32 %v1250, %v1246
        %v1253 = vld [vmem:[#allocation4 + $0x1] sm:$0xff]
        %v1254 = vpack.c.bf16 %v1253, %v1253
        %v1255 = vld [vmem:[%s11 + $0x28] sm:$0xf]
        %v1256 = vld [vmem:[%s11 + $0x2c] sm:$0xf]
        %v1257 = vld [vmem:[%s11 + $0x30] sm:$0xf]
        %v1258 = vld [vmem:[%s11 + $0x34] sm:$0xf]
        %v1259 = vld [vmem:[%s11 + $0x38] sm:$0xf]
        %v1260 = vld [vmem:[%s11 + $0x3c] sm:$0xf]
        %v1261 = vld [vmem:[%s11 + $0x40] sm:$0xf]
        %v1262 = vld [vmem:[%s11 + $0x44] sm:$0xf]
        %v1263 = vld [vmem:[%s11 + $0x48] sm:$0xf]
        %v1264 = vld [vmem:[%s11 + $0x4c] sm:$0xf]
        %v1275 = vunpack.c.l.b16 %v1255
        %v1276 = vunpack.c.l.b16 %v1256
        %v1277 = vunpack.c.l.b16 %v1257
        %v1278 = vunpack.c.l.b16 %v1258
        %v1279 = vunpack.c.l.b16 %v1259
        %v1280 = vunpack.c.l.b16 %v1260
        %v1281 = vunpack.c.l.b16 %v1261
        %v1282 = vunpack.c.l.b16 %v1262
        %v1283 = vunpack.c.l.b16 %v1263
        %v1284 = vunpack.c.l.b16 %v1264
        %v1285 = vpack.c.b16 %v1276, %v1275
        %v1286 = vpack.c.b16 %v1278, %v1277
        %v1287 = vpack.c.b16 %v1280, %v1279
        %v1288 = vpack.c.b16 %v1282, %v1281
        %v1289 = vpack.c.b16 %v1284, %v1283
        %v1296 = vsel %vm1167, %v1254, 0
        %1298 = vmatpush.bf16.msra.mxu0 0
        %1299 = vmatpush.bf16.msra.mxu0 0
        %1300 = vmatpush.bf16.msra.mxu0 0
        %1301 = vmatpush.bf16.msra.mxu0 %v1289
        %1302 = vmatpush.bf16.msra.mxu0 %v1288
        %1303 = vmatpush.bf16.msra.mxu0 %v1287
        %1304 = vmatpush.bf16.msra.mxu0 %v1286
        %1305 = vmatpush.bf16.msra.mxu0 %v1285
        %1306 = vmatmul.bf16.gmra.mxu0 %v1296
        %v1307 = vpop.f32.mrf.mxu0
        %v1308 = vadd.f32 0.0, %v1307
        %v1309 = vpop.f32.mrf.mxu0
        %1310 = vdwg.mxu0
        %v1311 = vadd.f32 %v1252, %v1308
        %v1312 = vld [vmem:[#allocation4 + $0x2] sm:$0xff]
        %v1313 = vpack.c.bf16 %v1312, %v1312
        %v1314 = vld [vmem:[%s11 + $0x50] sm:$0xf]
        %v1315 = vld [vmem:[%s11 + $0x54] sm:$0xf]
        %v1316 = vld [vmem:[%s11 + $0x58] sm:$0xf]
        %v1317 = vld [vmem:[%s11 + $0x5c] sm:$0xf]
        %v1318 = vld [vmem:[%s11 + $0x60] sm:$0xf]
        %v1319 = vld [vmem:[%s11 + $0x64] sm:$0xf]
        %v1320 = vld [vmem:[%s11 + $0x68] sm:$0xf]
        %v1321 = vld [vmem:[%s11 + $0x6c] sm:$0xf]
        %v1322 = vld [vmem:[%s11 + $0x70] sm:$0xf]
        %v1323 = vld [vmem:[%s11 + $0x74] sm:$0xf]
        %v1334 = vunpack.c.l.b16 %v1314
        %v1335 = vunpack.c.l.b16 %v1315
        %v1336 = vunpack.c.l.b16 %v1316
        %v1337 = vunpack.c.l.b16 %v1317
        %v1338 = vunpack.c.l.b16 %v1318
        %v1339 = vunpack.c.l.b16 %v1319
        %v1340 = vunpack.c.l.b16 %v1320
        %v1341 = vunpack.c.l.b16 %v1321
        %v1342 = vunpack.c.l.b16 %v1322
        %v1343 = vunpack.c.l.b16 %v1323
        %v1344 = vpack.c.b16 %v1335, %v1334
        %v1345 = vpack.c.b16 %v1337, %v1336
        %v1346 = vpack.c.b16 %v1339, %v1338
        %v1347 = vpack.c.b16 %v1341, %v1340
        %v1348 = vpack.c.b16 %v1343, %v1342
        %v1355 = vsel %vm1167, %v1313, 0
        %1357 = vmatpush.bf16.msra.mxu0 0
        %1358 = vmatpush.bf16.msra.mxu0 0
        %1359 = vmatpush.bf16.msra.mxu0 0
        %1360 = vmatpush.bf16.msra.mxu0 %v1348
        %1361 = vmatpush.bf16.msra.mxu0 %v1347
        %1362 = vmatpush.bf16.msra.mxu0 %v1346
        %1363 = vmatpush.bf16.msra.mxu0 %v1345
        %1364 = vmatpush.bf16.msra.mxu0 %v1344
        %1365 = vmatmul.bf16.gmra.mxu0 %v1355
        %v1366 = vpop.f32.mrf.mxu0
        %v1367 = vadd.f32 0.0, %v1366
        %v1368 = vpop.f32.mrf.mxu0
        %1369 = vdwg.mxu0
        %v1370 = vadd.f32 %v1311, %v1367
        %v1371 = vtanh.pop %v1370
        %vm1372 = vcmask 385024
        %1373 = vst.msk [vmem:[%s484] sm:$0x1] %vm1372, %v1371
        %vm1374 = vcmask 386049
        %1375 = vst.msk [vmem:[%s484 + $0x1] sm:$0x2] %vm1374, %v1371
        %vm1376 = vcmask 387074
        %1377 = vst.msk [vmem:[%s484 + $0x2] sm:$0x4] %vm1376, %v1371
        %vm1378 = vcmask 388099
        %1379 = vst.msk [vmem:[%s484 + $0x3] sm:$0x8] %vm1378, %v1371
        %vm1380 = vcmask 389124
        %1381 = vst.msk [vmem:[%s484 + $0x4] sm:$0x10] %vm1380, %v1371
        %vm1382 = vcmask 390149
        %1383 = vst.msk [vmem:[%s484 + $0x5] sm:$0x20] %vm1382, %v1371
        %vm1384 = vcmask 391174
        %1385 = vst.msk [vmem:[%s484 + $0x6] sm:$0x40] %vm1384, %v1371
        %vm1386 = vcmask 392199
        %1387 = vst.msk [vmem:[%s484 + $0x7] sm:$0x80] %vm1386, %v1371
        %1389 = vrot.lane.b32.xlu0 %v1371, 80
        %v1390 = vpop.permute.xlu0 %1389
        %1392 = vst.msk [vmem:[%s484 + $0x1] sm:$0x1] %vm1372, %v1390
        %1393 = vst.msk [vmem:[%s484 + $0x2] sm:$0x2] %vm1374, %v1390
        %1394 = vst.msk [vmem:[%s484 + $0x3] sm:$0x4] %vm1376, %v1390
        %1395 = vst.msk [vmem:[%s484 + $0x4] sm:$0x8] %vm1378, %v1390
        %1396 = vst.msk [vmem:[%s484 + $0x5] sm:$0x10] %vm1380, %v1390
        %1397 = vst.msk [vmem:[%s484 + $0x6] sm:$0x20] %vm1382, %v1390
        %1398 = vst.msk [vmem:[%s484 + $0x7] sm:$0x40] %vm1384, %v1390
        %1399 = vst.msk [vmem:[%s484 + $0x8] sm:$0x80] %vm1386, %v1390
        %s1400 = smul.u32 2, %s26
        %p1401 = scmp.lt.s32.totalorder %s1400, 3
        %s1402 = scalar_select %p1401, %s1400, 3
        %s1403 = smul.addr %s1402, 8
        %s1404 = scalar_lea.vmem %s13, %s1403
        // Predicated region
        $region85: #{generator_forward.1} parent=71 // pred_check
          %p1405 = pneg %p322
        $region86: #{generator_forward.1} parent=71 // pred_check_branch
          %1407 = sbr.rel (%p1405) target = $region88
        $region87: #{generator_forward.1} parent=71 // pred_region
          %s1408 = smul.u32 2, %s26
        $region88: #{generator_forward.1} parent=71 // pred_fallthru
          _
      $region72: #{generator_forward.1} parent=5 // pred_fallthru
        _
      %p1409 = scmp.le.s32.totalorder 2, %s21
      // Predicated region
      $region89: #{generator_forward.1} parent=5 // pred_check
        %p1410 = pneg %p1409
      $region90: #{generator_forward.1} parent=5 // pred_check_branch
        %1412 = sbr.rel (%p1410) target = $region92
      $region91: #{generator_forward.1} parent=5 // pred_region
        %s1413 = ssub.s32 %s21, 2
        // Predicated region
        $region93: #{generator_forward.1} parent=91 // pred_check
          %p1414 = pneg %p328
        $region94: #{generator_forward.1} parent=91 // pred_check_branch
          %1416 = sbr.rel (%p1414) target = $region96
        $region95: #{generator_forward.1} parent=91 // pred_region
          %s1417 = smul.u32 2, %s27
          %p1418 = scmp.lt.s32.totalorder %s1417, 3
          %s1419 = scalar_select %p1418, %s1417, 3
          %s1420 = smul.addr %s1419, 8
          %s1421 = scalar_lea.vmem %s13, %s1420
        $region96: #{generator_forward.1} parent=91 // pred_fallthru
          _
      $region92: #{generator_forward.1} parent=5 // pred_fallthru
        _
    $region6: #{generator_forward.1} parent=1 // loop_footer
      %s25 = sadd.s32 1, %s21
    $region7: #{generator_forward.1} parent=1 // loop_footer_branch
      %20 = sbr.rel target = $region3
    $region8: #{generator_forward.1} parent=1 // loop_exit
      _
    %1422 = vsyncpa [#allocation6], 1
    %s1423 = scalar_lea.sflag [#allocation6], 1
    %1424 = vsyncpa %s1423, 1
    %1425 = vsyncpa [#allocation8], 1

</llo_original>
